<compile_context>
chip_gen: v7x
topology: tpu7x:2x2x1
jax: 0.10.0
libtpu: 0.0.40
codegen_flags: <defaults>
</compile_context>

<pallas_src>
import jax
import jax.numpy as jnp
from jax.experimental import pallas as pl
from jax.experimental.pallas import tpu as pltpu


def gcn_kernel(a_ref, x_ref, w1_ref, b1_ref, w2_ref, b2_ref,
               wfc_ref, bfc_ref, out_ref):
    # a_ref: (GB, N, N) bf16, x_ref: (GB, N, Fin) bf16, out_ref: (GB, C) f32
    GB, N, _ = a_ref.shape
    Fin = x_ref.shape[2]
    H = w1_ref.shape[1]
    H2 = w2_ref.shape[1]

    a = a_ref[...]                                      # (GB, N, N) bf16

    # GraphConv 1: relu(Â X W1 + b1)
    xw1 = jnp.dot(x_ref[...].reshape(GB * N, Fin), w1_ref[...],
                  preferred_element_type=jnp.float32)   # (GB*N, H) f32
    xw1 = xw1.astype(jnp.bfloat16).reshape(GB, N, H)
    h1 = jnp.einsum('bij,bjh->bih', a, xw1,
                    preferred_element_type=jnp.float32) # (GB, N, H) f32
    h1 = jnp.maximum(h1 + b1_ref[...], 0.0)

    # GraphConv 2: Â h1 W2 + b2
    hw2 = jnp.dot(h1.astype(jnp.bfloat16).reshape(GB * N, H), w2_ref[...],
                  preferred_element_type=jnp.float32)   # (GB*N, H2) f32
    hw2 = hw2.astype(jnp.bfloat16).reshape(GB, N, H2)
    h2 = jnp.einsum('bij,bjk->bik', a, hw2,
                    preferred_element_type=jnp.float32) + b2_ref[...]

    # mean_nodes + fc: 1/N is folded into wfc, so a plain node-sum feeds
    # the final MXU matmul.
    # TODO(synk): dgl.mean_nodes on ragged batches needs per-graph node counts
    # (scalar prefetch) for the divisor; here every graph has exactly N nodes.
    pooled = jnp.sum(h2, axis=1)                        # (GB, H2) f32
    out_ref[...] = (jnp.dot(pooled, wfc_ref[...],
                            preferred_element_type=jnp.float32)
                    + bfc_ref[...]).astype(out_ref.dtype)


def gcn_forward(a_norm, x, w1, b1, w2, b2, wfc, bfc, *, graphs_per_block=8):
    G, N, Fin = x.shape
    H = w1.shape[1]
    H2 = w2.shape[1]
    C = wfc.shape[1]

    # Graph-block size: sublane-aligned (multiple of 8) when possible.
    GB = min(graphs_per_block, G)
    G_pad = pl.cdiv(G, GB) * GB
    if G_pad != G:
        pad = G_pad - G
        a_norm = jnp.concatenate(
            [a_norm, jnp.zeros((pad, N, N), a_norm.dtype)], axis=0)
        x = jnp.concatenate([x, jnp.zeros((pad, N, Fin), x.dtype)], axis=0)

    # bf16 inputs for the MXU (f32 accumulation inside the kernel); biases and
    # the tiny fc stay in f32.
    a_bf = a_norm.astype(jnp.bfloat16)
    x_bf = x.astype(jnp.bfloat16)
    w1_bf = w1.astype(jnp.bfloat16)
    w2_bf = w2.astype(jnp.bfloat16)

    b1r = b1.reshape(1, H).astype(jnp.float32)
    b2r = b2.reshape(1, H2).astype(jnp.float32)
    bfcr = bfc.reshape(1, C).astype(jnp.float32)
    # Fold mean_nodes' 1/N into the fc weight: mean @ Wfc == sum @ (Wfc / N).
    wfc_scaled = (wfc / N).astype(jnp.float32)

    # TODO(synk): for large N, row-tile Â into (TN, N) panels over an
    # 'arbitrary' grid axis so double-buffered panels fit v7x's 64 MiB VMEM
    # instead of pulling the whole per-graph Â per step.
    out = pl.pallas_call(
        gcn_kernel,
        out_shape=jax.ShapeDtypeStruct((G_pad, C), jnp.float32),
        grid_spec=pltpu.PrefetchScalarGridSpec(
            num_scalar_prefetch=0,
            grid=(G_pad // GB,),
            in_specs=[
                pl.BlockSpec((GB, N, N), lambda g: (g, 0, 0)),    # Â block
                pl.BlockSpec((GB, N, Fin), lambda g: (g, 0, 0)),  # X block
                pl.BlockSpec((Fin, H), lambda g: (0, 0)),         # W1
                pl.BlockSpec((1, H), lambda g: (0, 0)),           # b1
                pl.BlockSpec((H, H2), lambda g: (0, 0)),          # W2
                pl.BlockSpec((1, H2), lambda g: (0, 0)),          # b2
                pl.BlockSpec((H2, C), lambda g: (0, 0)),          # Wfc / N
                pl.BlockSpec((1, C), lambda g: (0, 0)),           # bfc
            ],
            out_specs=pl.BlockSpec((GB, C), lambda g: (g, 0)),
        ),
        compiler_params=pltpu.CompilerParams(
            dimension_semantics=("parallel",)),
    )(a_bf, x_bf, w1_bf, b1r, w2_bf, b2r, wfc_scaled, bfcr)
    return out[:G]


def build_normalized_adj(key, G, N):
    """Random symmetric adjacency with self-loops, D^{-1/2} A D^{-1/2}."""
    bits = jax.random.bernoulli(key, p=0.3, shape=(G, N, N)).astype(jnp.float32)
    a = jnp.maximum(bits, jnp.transpose(bits, (0, 2, 1)))          # symmetric
    eye = jnp.eye(N, dtype=jnp.float32)[None, :, :]
    a = jnp.maximum(a, eye)                                        # self-loops
    deg = a.sum(axis=-1)                                           # (G, N)
    dinv = 1.0 / jnp.sqrt(deg)
    return a * dinv[:, :, None] * dinv[:, None, :]


if __name__ == "__main__":
    # 16 graphs of 8 nodes, in_feats=8, h_feats=32 -> h2=16, classes=4.
    # GB=8 -> grid=(2,), so both v7x TensorCores get a step.
    G, N = 16, 8
    in_feats, h_feats, num_classes = 8, 32, 4
    h2 = h_feats // 2

    key = jax.random.PRNGKey(0)
    k_adj, k_x, k_w1, k_b1, k_w2, k_b2, k_wfc, k_bfc = jax.random.split(key, 8)

    a_norm = build_normalized_adj(k_adj, G, N)
    x = jax.random.normal(k_x, (G, N, in_feats), dtype=jnp.float32)

    # Deterministic synthetic parameters (match module shapes).
    w1 = 0.1 * jax.random.normal(k_w1, (in_feats, h_feats), dtype=jnp.float32)
    b1 = 0.1 * jax.random.normal(k_b1, (h_feats,), dtype=jnp.float32)
    w2 = 0.1 * jax.random.normal(k_w2, (h_feats, h2), dtype=jnp.float32)
    b2 = 0.1 * jax.random.normal(k_b2, (h2,), dtype=jnp.float32)
    # nn.Linear stores (num_classes, h2); we pass the transpose (h2, num_classes)
    wfc = 0.1 * jax.random.normal(k_wfc, (h2, num_classes), dtype=jnp.float32)
    bfc = 0.1 * jax.random.normal(k_bfc, (num_classes,), dtype=jnp.float32)

    out = gcn_forward(a_norm, x, w1, b1, w2, b2, wfc, bfc)
    out = jax.block_until_ready(out)

    # Pure-JAX f32 reference (module semantics); kernel uses bf16 MXU inputs
    # with f32 accumulation, so compare with a bf16-sized tolerance.
    def ref(a, xx):
        h = jnp.maximum(jnp.einsum("gij,gjf,fh->gih", a, xx, w1) + b1, 0.0)
        h = jnp.einsum("gij,gjf,fh->gih", a, h, w2) + b2
        m = h.mean(axis=1)
        return m @ wfc + bfc

    ref_out = ref(a_norm, x)
    assert out.shape == (G, num_classes)
    assert jnp.allclose(out, ref_out, atol=3e-2, rtol=3e-2), "mismatch vs reference"
    print("KERNEL_OK")
</pallas_src>

<mosaic_0001>
module attributes {stable_mosaic.version = 11 : i64} {
  func.func @gcn_kernel(%arg0: i32, %arg1: memref<8x8x8xbf16, #tpu.memory_space<vmem>>, %arg2: memref<8x8x8xbf16, #tpu.memory_space<vmem>>, %arg3: memref<8x32xbf16, #tpu.memory_space<vmem>>, %arg4: memref<1x32xf32, #tpu.memory_space<vmem>>, %arg5: memref<32x16xbf16, #tpu.memory_space<vmem>>, %arg6: memref<1x16xf32, #tpu.memory_space<vmem>>, %arg7: memref<16x4xf32, #tpu.memory_space<vmem>>, %arg8: memref<1x4xf32, #tpu.memory_space<vmem>>, %arg9: memref<8x4xf32, #tpu.memory_space<vmem>>) attributes {dimension_semantics = [#tpu.dimension_semantics<parallel>], iteration_bounds = array<i64: 2>, scalar_prefetch = 0 : i64, scratch_operands = 0 : i64, tpu.core_type = #tpu.core_type<tc>, window_params = [{transform_indices = @transform_0, window_bounds = array<i64: 8, 8, 8>}, {transform_indices = @transform_1, window_bounds = array<i64: 8, 8, 8>}, {pipeline_mode = #tpu.pipeline_mode<synchronous>, transform_indices = @transform_2, window_bounds = array<i64: 8, 32>}, {pipeline_mode = #tpu.pipeline_mode<synchronous>, transform_indices = @transform_3, window_bounds = array<i64: 1, 32>}, {pipeline_mode = #tpu.pipeline_mode<synchronous>, transform_indices = @transform_4, window_bounds = array<i64: 32, 16>}, {pipeline_mode = #tpu.pipeline_mode<synchronous>, transform_indices = @transform_5, window_bounds = array<i64: 1, 16>}, {pipeline_mode = #tpu.pipeline_mode<synchronous>, transform_indices = @transform_6, window_bounds = array<i64: 16, 4>}, {pipeline_mode = #tpu.pipeline_mode<synchronous>, transform_indices = @transform_7, window_bounds = array<i64: 1, 4>}, {transform_indices = @transform_8, window_bounds = array<i64: 8, 4>}]} {
    %c0 = arith.constant 0 : index
    %c0_0 = arith.constant 0 : index
    %c0_1 = arith.constant 0 : index
    %0 = vector.load %arg1[%c0, %c0_0, %c0_1] : memref<8x8x8xbf16, #tpu.memory_space<vmem>>, vector<8x8x8xbf16>
    %c0_2 = arith.constant 0 : index
    %c0_3 = arith.constant 0 : index
    %c0_4 = arith.constant 0 : index
    %1 = vector.load %arg2[%c0_2, %c0_3, %c0_4] : memref<8x8x8xbf16, #tpu.memory_space<vmem>>, vector<8x8x8xbf16>
    %2 = vector.shape_cast %1 : vector<8x8x8xbf16> to vector<64x8xbf16>
    %c0_5 = arith.constant 0 : index
    %c0_6 = arith.constant 0 : index
    %3 = vector.load %arg3[%c0_5, %c0_6] : memref<8x32xbf16, #tpu.memory_space<vmem>>, vector<8x32xbf16>
    %cst = arith.constant dense<0.000000e+00> : vector<64x32xf32>
    %4 = tpu.matmul %2, %3, %cst {dimension_numbers = #tpu.dot_dimension_numbers<[1], [0], [0], [1], [0, 0, 1, 1], [], []>} : vector<64x8xbf16>, vector<8x32xbf16>, vector<64x32xf32> -> vector<64x32xf32>
    %5 = arith.truncf %4 : vector<64x32xf32> to vector<64x32xbf16>
    %6 = vector.shape_cast %5 : vector<64x32xbf16> to vector<8x8x32xbf16>
    "tpu.trace_start"() <{level = 10 : i32, message = "bij,bjh->bih"}> : () -> ()
    %cst_7 = arith.constant dense<0.000000e+00> : vector<8x8x32xf32>
    %7 = tpu.matmul %0, %6, %cst_7 {dimension_numbers = #tpu.dot_dimension_numbers<[2], [1], [1], [2], [0, 0, 0, 1, 1, 2], [0], [0]>} : vector<8x8x8xbf16>, vector<8x8x32xbf16>, vector<8x8x32xf32> -> vector<8x8x32xf32>
    "tpu.trace_stop"() : () -> ()
    %c0_8 = arith.constant 0 : index
    %c0_9 = arith.constant 0 : index
    %8 = vector.load %arg4[%c0_8, %c0_9] : memref<1x32xf32, #tpu.memory_space<vmem>>, vector<1x32xf32>
    %9 = vector.shape_cast %8 : vector<1x32xf32> to vector<1x1x32xf32>
    %10 = vector.broadcast %9 : vector<1x1x32xf32> to vector<8x8x32xf32>
    %11 = arith.addf %7, %10 : vector<8x8x32xf32>
    %cst_10 = arith.constant 0.000000e+00 : f32
    %12 = vector.broadcast %cst_10 : f32 to vector<8x8x32xf32>
    %13 = arith.maximumf %11, %12 : vector<8x8x32xf32>
    %14 = arith.truncf %13 : vector<8x8x32xf32> to vector<8x8x32xbf16>
    %15 = vector.shape_cast %14 : vector<8x8x32xbf16> to vector<64x32xbf16>
    %c0_11 = arith.constant 0 : index
    %c0_12 = arith.constant 0 : index
    %16 = vector.load %arg5[%c0_11, %c0_12] : memref<32x16xbf16, #tpu.memory_space<vmem>>, vector<32x16xbf16>
    %cst_13 = arith.constant dense<0.000000e+00> : vector<64x16xf32>
    %17 = tpu.matmul %15, %16, %cst_13 {dimension_numbers = #tpu.dot_dimension_numbers<[1], [0], [0], [1], [0, 0, 1, 1], [], []>} : vector<64x32xbf16>, vector<32x16xbf16>, vector<64x16xf32> -> vector<64x16xf32>
    %18 = arith.truncf %17 : vector<64x16xf32> to vector<64x16xbf16>
    %19 = vector.shape_cast %18 : vector<64x16xbf16> to vector<8x8x16xbf16>
    "tpu.trace_start"() <{level = 10 : i32, message = "bij,bjk->bik"}> : () -> ()
    %cst_14 = arith.constant dense<0.000000e+00> : vector<8x8x16xf32>
    %20 = tpu.matmul %0, %19, %cst_14 {dimension_numbers = #tpu.dot_dimension_numbers<[2], [1], [1], [2], [0, 0, 0, 1, 1, 2], [0], [0]>} : vector<8x8x8xbf16>, vector<8x8x16xbf16>, vector<8x8x16xf32> -> vector<8x8x16xf32>
    "tpu.trace_stop"() : () -> ()
    %c0_15 = arith.constant 0 : index
    %c0_16 = arith.constant 0 : index
    %21 = vector.load %arg6[%c0_15, %c0_16] : memref<1x16xf32, #tpu.memory_space<vmem>>, vector<1x16xf32>
    %22 = vector.shape_cast %21 : vector<1x16xf32> to vector<1x1x16xf32>
    %23 = vector.broadcast %22 : vector<1x1x16xf32> to vector<8x8x16xf32>
    %24 = arith.addf %20, %23 : vector<8x8x16xf32>
    %cst_17 = arith.constant dense<0.000000e+00> : vector<8x16xf32>
    %25 = vector.multi_reduction <add>, %24, %cst_17 [1] : vector<8x8x16xf32> to vector<8x16xf32>
    %c0_18 = arith.constant 0 : index
    %c0_19 = arith.constant 0 : index
    %26 = vector.load %arg7[%c0_18, %c0_19] : memref<16x4xf32, #tpu.memory_space<vmem>>, vector<16x4xf32>
    %cst_20 = arith.constant dense<0.000000e+00> : vector<8x4xf32>
    %27 = tpu.matmul %25, %26, %cst_20 {dimension_numbers = #tpu.dot_dimension_numbers<[1], [0], [0], [1], [0, 0, 1, 1], [], []>} : vector<8x16xf32>, vector<16x4xf32>, vector<8x4xf32> -> vector<8x4xf32>
    %c0_21 = arith.constant 0 : index
    %c0_22 = arith.constant 0 : index
    %28 = vector.load %arg8[%c0_21, %c0_22] : memref<1x4xf32, #tpu.memory_space<vmem>>, vector<1x4xf32>
    %29 = vector.broadcast %28 : vector<1x4xf32> to vector<8x4xf32>
    %30 = arith.addf %27, %29 : vector<8x4xf32>
    %c0_23 = arith.constant 0 : index
    %c0_24 = arith.constant 0 : index
    %31 = vector.load %arg9[%c0_23, %c0_24] : memref<8x4xf32, #tpu.memory_space<vmem>>, vector<8x4xf32>
    tpu.vector_store %arg9[%c0_23, %c0_24], %30 {strides = array<i32>} : memref<8x4xf32, #tpu.memory_space<vmem>>, vector<8x4xf32>,
    return
  }
  func.func @transform_0(%arg0: i32) -> (i32, i32, i32) {
    %c0_i32 = arith.constant 0 : i32
    %c0_i32_0 = arith.constant 0 : i32
    %c0_i32_1 = arith.constant 0 : i32
    return %arg0, %c0_i32, %c0_i32_0 : i32, i32, i32
  }
  func.func @transform_1(%arg0: i32) -> (i32, i32, i32) {
    %c0_i32 = arith.constant 0 : i32
    %c0_i32_0 = arith.constant 0 : i32
    %c0_i32_1 = arith.constant 0 : i32
    return %arg0, %c0_i32, %c0_i32_0 : i32, i32, i32
  }
  func.func @transform_2(%arg0: i32) -> (i32, i32) {
    %c0_i32 = arith.constant 0 : i32
    %c0_i32_0 = arith.constant 0 : i32
    %c0_i32_1 = arith.constant 0 : i32
    return %c0_i32, %c0_i32_0 : i32, i32
  }
  func.func @transform_3(%arg0: i32) -> (i32, i32) {
    %c0_i32 = arith.constant 0 : i32
    %c0_i32_0 = arith.constant 0 : i32
    %c0_i32_1 = arith.constant 0 : i32
    return %c0_i32, %c0_i32_0 : i32, i32
  }
  func.func @transform_4(%arg0: i32) -> (i32, i32) {
    %c0_i32 = arith.constant 0 : i32
    %c0_i32_0 = arith.constant 0 : i32
    %c0_i32_1 = arith.constant 0 : i32
    return %c0_i32, %c0_i32_0 : i32, i32
  }
  func.func @transform_5(%arg0: i32) -> (i32, i32) {
    %c0_i32 = arith.constant 0 : i32
    %c0_i32_0 = arith.constant 0 : i32
    %c0_i32_1 = arith.constant 0 : i32
    return %c0_i32, %c0_i32_0 : i32, i32
  }
  func.func @transform_6(%arg0: i32) -> (i32, i32) {
    %c0_i32 = arith.constant 0 : i32
    %c0_i32_0 = arith.constant 0 : i32
    %c0_i32_1 = arith.constant 0 : i32
    return %c0_i32, %c0_i32_0 : i32, i32
  }
  func.func @transform_7(%arg0: i32) -> (i32, i32) {
    %c0_i32 = arith.constant 0 : i32
    %c0_i32_0 = arith.constant 0 : i32
    %c0_i32_1 = arith.constant 0 : i32
    return %c0_i32, %c0_i32_0 : i32, i32
  }
  func.func @transform_8(%arg0: i32) -> (i32, i32) {
    %c0_i32 = arith.constant 0 : i32
    %c0_i32_0 = arith.constant 0 : i32
    return %arg0, %c0_i32 : i32, i32
  }
}

</mosaic_0001>

<llo_original>
// kernel: tpu_custom_call.1
$region0: #{tpu_custom_call.1}
  #allocation0 [shape = 'u32[]', space=smem, size = 0x4, offset = 0x4, fixed_abs, tag = 'smem constant byte address 0x4 - core index']
  #allocation1 [shape = 'u32[144,128]{1,0:T(1,128)}', space=vmem, size = 0x12000, scoped, tag = 'internal scratch']
  %s0 = inlined_call_operand.vmem [shape: bf16[16,8,8], index: 0, kind: input, shape index: {}]
  %s1 = inlined_call_operand.vmem [shape: bf16[16,8,8], index: 1, kind: input, shape index: {}]
  %s2 = inlined_call_operand.vmem [shape: bf16[8,32], index: 2, kind: input, shape index: {}]
  %s3 = inlined_call_operand.vmem [shape: f32[1,32], index: 3, kind: input, shape index: {}]
  %s4 = inlined_call_operand.vmem [shape: bf16[32,16], index: 4, kind: input, shape index: {}]
  %s5 = inlined_call_operand.vmem [shape: f32[1,16], index: 5, kind: input, shape index: {}]
  %s6 = inlined_call_operand.vmem [shape: f32[16,4], index: 6, kind: input, shape index: {}]
  %s7 = inlined_call_operand.vmem [shape: f32[1,4], index: 7, kind: input, shape index: {}]
  %s8 = inlined_call_operand.vmem [shape: f32[16,4], index: 8, kind: output, shape index: {}]
  %s9 = sld [smem:[#allocation0]]
  $region65: #{tpu_custom_call.1} parent=0
    _
  %s11 = ssub.s32 1, %s9
  %s12 = scalar_select 0, %s11, %s9
  loop: start=0, step=1, limit=4
  $region2: #{tpu_custom_call.1} parent=0 // loop_pre_header
    _
  $region3: #{tpu_custom_call.1} parent=0 // loop_header
    %s14 = sphi 0, %s18
    %p15 = scmp.ge.s32.totalorder %s14, 4
    %s24 = sphi 0, %s26
    %s27 = sphi 0, %s24
    %s28 = sphi 0, %s27
    %s44 = sphi 0, %s28
    %s50 = sphi 0, %s52
    %s53 = sphi 0, %s50
    %s54 = sphi 0, %s53
    %s70 = sphi 0, %s54
    %s74 = sphi 0, %s74
    %s76 = sphi 0, %s74
    %s77 = sphi 0, %s76
    %s91 = sphi 0, %s77
    %s95 = sphi 0, %s95
    %s97 = sphi 0, %s95
    %s98 = sphi 0, %s97
    %s112 = sphi 0, %s98
    %s116 = sphi 0, %s116
    %s118 = sphi 0, %s116
    %s119 = sphi 0, %s118
    %s133 = sphi 0, %s119
    %s137 = sphi 0, %s137
    %s139 = sphi 0, %s137
    %s140 = sphi 0, %s139
    %s154 = sphi 0, %s140
    %s158 = sphi 0, %s158
    %s160 = sphi 0, %s158
    %s161 = sphi 0, %s160
    %s175 = sphi 0, %s161
    %s179 = sphi 0, %s179
    %s181 = sphi 0, %s179
    %s182 = sphi 0, %s181
    %s196 = sphi 0, %s182
    %s202 = sphi 0, %s204
    %s205 = sphi 0, %s202
    %s206 = sphi 0, %s205
    %s222 = sphi 0, %s206
  $region4: #{tpu_custom_call.1} parent=0 // loop_header_branch
    %17 = sbr.rel (%p15) target = $region8
  $region5: #{tpu_custom_call.1} parent=0 // loop_body
    %s19 = ssub.s32 %s14, 1
    %s20 = ssub.s32 %s14, 2
    %s21 = sadd.s32 %s14, 1
    %s22 = ssub.s32 %s14, %s21
    %p23 = scmp.eq.s32.totalorder %s22, 0
    %s25 = sadd.s32 %s24, 1
    %s26 = scalar_select %p23, %s24, %s25
    %p29 = pneg %p23
    %p30 = scmp.eq.s32.totalorder %s14, 1
    %p31 = por %p29, %p30
    %p32 = scmp.ne.s32.totalorder %s24, %s27
    %p33 = scmp.eq.s32.totalorder %s14, 0
    %p34 = por %p32, %p33
    %p35 = scmp.ne.s32.totalorder %s24, %s27
    %p36 = scmp.eq.s32.totalorder %s19, 1
    %p37 = por %p35, %p36
    %p38 = scmp.ne.s32.totalorder %s27, %s28
    %p39 = scmp.eq.s32.totalorder %s19, 0
    %p40 = por %p38, %p39
    %p41 = scmp.ne.s32.totalorder %s27, %s28
    %p42 = scmp.eq.s32.totalorder %s20, 1
    %p43 = por %p41, %p42
    %p45 = scmp.ne.s32.totalorder %s28, %s44
    %p46 = scmp.eq.s32.totalorder %s20, 0
    %p47 = por %p45, %p46
    %s48 = ssub.s32 %s14, %s21
    %p49 = scmp.eq.s32.totalorder %s48, 0
    %s51 = sadd.s32 %s50, 1
    %s52 = scalar_select %p49, %s50, %s51
    %p55 = pneg %p49
    %p56 = scmp.eq.s32.totalorder %s14, 1
    %p57 = por %p55, %p56
    %p58 = scmp.ne.s32.totalorder %s50, %s53
    %p59 = scmp.eq.s32.totalorder %s14, 0
    %p60 = por %p58, %p59
    %p61 = scmp.ne.s32.totalorder %s50, %s53
    %p62 = scmp.eq.s32.totalorder %s19, 1
    %p63 = por %p61, %p62
    %p64 = scmp.ne.s32.totalorder %s53, %s54
    %p65 = scmp.eq.s32.totalorder %s19, 0
    %p66 = por %p64, %p65
    %p67 = scmp.ne.s32.totalorder %s53, %s54
    %p68 = scmp.eq.s32.totalorder %s20, 1
    %p69 = por %p67, %p68
    %p71 = scmp.ne.s32.totalorder %s54, %s70
    %p72 = scmp.eq.s32.totalorder %s20, 0
    %p73 = por %p71, %p72
    %s75 = sadd.s32 %s74, 1
    %p78 = scmp.eq.s32.totalorder %s14, 1
    %p79 = scmp.ne.s32.totalorder %s74, %s76
    %p80 = scmp.eq.s32.totalorder %s14, 0
    %p81 = por %p79, %p80
    %p82 = scmp.ne.s32.totalorder %s74, %s76
    %p83 = scmp.eq.s32.totalorder %s19, 1
    %p84 = por %p82, %p83
    %p85 = scmp.ne.s32.totalorder %s76, %s77
    %p86 = scmp.eq.s32.totalorder %s19, 0
    %p87 = por %p85, %p86
    %p88 = scmp.ne.s32.totalorder %s76, %s77
    %p89 = scmp.eq.s32.totalorder %s20, 1
    %p90 = por %p88, %p89
    %p92 = scmp.ne.s32.totalorder %s77, %s91
    %p93 = scmp.eq.s32.totalorder %s20, 0
    %p94 = por %p92, %p93
    %s96 = sadd.s32 %s95, 1
    %p99 = scmp.eq.s32.totalorder %s14, 1
    %p100 = scmp.ne.s32.totalorder %s95, %s97
    %p101 = scmp.eq.s32.totalorder %s14, 0
    %p102 = por %p100, %p101
    %p103 = scmp.ne.s32.totalorder %s95, %s97
    %p104 = scmp.eq.s32.totalorder %s19, 1
    %p105 = por %p103, %p104
    %p106 = scmp.ne.s32.totalorder %s97, %s98
    %p107 = scmp.eq.s32.totalorder %s19, 0
    %p108 = por %p106, %p107
    %p109 = scmp.ne.s32.totalorder %s97, %s98
    %p110 = scmp.eq.s32.totalorder %s20, 1
    %p111 = por %p109, %p110
    %p113 = scmp.ne.s32.totalorder %s98, %s112
    %p114 = scmp.eq.s32.totalorder %s20, 0
    %p115 = por %p113, %p114
    %s117 = sadd.s32 %s116, 1
    %p120 = scmp.eq.s32.totalorder %s14, 1
    %p121 = scmp.ne.s32.totalorder %s116, %s118
    %p122 = scmp.eq.s32.totalorder %s14, 0
    %p123 = por %p121, %p122
    %p124 = scmp.ne.s32.totalorder %s116, %s118
    %p125 = scmp.eq.s32.totalorder %s19, 1
    %p126 = por %p124, %p125
    %p127 = scmp.ne.s32.totalorder %s118, %s119
    %p128 = scmp.eq.s32.totalorder %s19, 0
    %p129 = por %p127, %p128
    %p130 = scmp.ne.s32.totalorder %s118, %s119
    %p131 = scmp.eq.s32.totalorder %s20, 1
    %p132 = por %p130, %p131
    %p134 = scmp.ne.s32.totalorder %s119, %s133
    %p135 = scmp.eq.s32.totalorder %s20, 0
    %p136 = por %p134, %p135
    %s138 = sadd.s32 %s137, 1
    %p141 = scmp.eq.s32.totalorder %s14, 1
    %p142 = scmp.ne.s32.totalorder %s137, %s139
    %p143 = scmp.eq.s32.totalorder %s14, 0
    %p144 = por %p142, %p143
    %p145 = scmp.ne.s32.totalorder %s137, %s139
    %p146 = scmp.eq.s32.totalorder %s19, 1
    %p147 = por %p145, %p146
    %p148 = scmp.ne.s32.totalorder %s139, %s140
    %p149 = scmp.eq.s32.totalorder %s19, 0
    %p150 = por %p148, %p149
    %p151 = scmp.ne.s32.totalorder %s139, %s140
    %p152 = scmp.eq.s32.totalorder %s20, 1
    %p153 = por %p151, %p152
    %p155 = scmp.ne.s32.totalorder %s140, %s154
    %p156 = scmp.eq.s32.totalorder %s20, 0
    %p157 = por %p155, %p156
    %s159 = sadd.s32 %s158, 1
    %p162 = scmp.eq.s32.totalorder %s14, 1
    %p163 = scmp.ne.s32.totalorder %s158, %s160
    %p164 = scmp.eq.s32.totalorder %s14, 0
    %p165 = por %p163, %p164
    %p166 = scmp.ne.s32.totalorder %s158, %s160
    %p167 = scmp.eq.s32.totalorder %s19, 1
    %p168 = por %p166, %p167
    %p169 = scmp.ne.s32.totalorder %s160, %s161
    %p170 = scmp.eq.s32.totalorder %s19, 0
    %p171 = por %p169, %p170
    %p172 = scmp.ne.s32.totalorder %s160, %s161
    %p173 = scmp.eq.s32.totalorder %s20, 1
    %p174 = por %p172, %p173
    %p176 = scmp.ne.s32.totalorder %s161, %s175
    %p177 = scmp.eq.s32.totalorder %s20, 0
    %p178 = por %p176, %p177
    %s180 = sadd.s32 %s179, 1
    %p183 = scmp.eq.s32.totalorder %s14, 1
    %p184 = scmp.ne.s32.totalorder %s179, %s181
    %p185 = scmp.eq.s32.totalorder %s14, 0
    %p186 = por %p184, %p185
    %p187 = scmp.ne.s32.totalorder %s179, %s181
    %p188 = scmp.eq.s32.totalorder %s19, 1
    %p189 = por %p187, %p188
    %p190 = scmp.ne.s32.totalorder %s181, %s182
    %p191 = scmp.eq.s32.totalorder %s19, 0
    %p192 = por %p190, %p191
    %p193 = scmp.ne.s32.totalorder %s181, %s182
    %p194 = scmp.eq.s32.totalorder %s20, 1
    %p195 = por %p193, %p194
    %p197 = scmp.ne.s32.totalorder %s182, %s196
    %p198 = scmp.eq.s32.totalorder %s20, 0
    %p199 = por %p197, %p198
    %s200 = ssub.s32 %s14, %s21
    %p201 = scmp.eq.s32.totalorder %s200, 0
    %s203 = sadd.s32 %s202, 1
    %s204 = scalar_select %p201, %s202, %s203
    %p207 = pneg %p201
    %p208 = scmp.eq.s32.totalorder %s14, 1
    %p209 = por %p207, %p208
    %p210 = scmp.ne.s32.totalorder %s202, %s205
    %p211 = scmp.eq.s32.totalorder %s14, 0
    %p212 = por %p210, %p211
    %p213 = scmp.ne.s32.totalorder %s202, %s205
    %p214 = scmp.eq.s32.totalorder %s19, 1
    %p215 = por %p213, %p214
    %p216 = scmp.ne.s32.totalorder %s205, %s206
    %p217 = scmp.eq.s32.totalorder %s19, 0
    %p218 = por %p216, %p217
    %p219 = scmp.ne.s32.totalorder %s205, %s206
    %p220 = scmp.eq.s32.totalorder %s20, 1
    %p221 = por %p219, %p220
    %p223 = scmp.ne.s32.totalorder %s206, %s222
    %p224 = scmp.eq.s32.totalorder %s20, 0
    %p225 = por %p223, %p224
    %p226 = scmp.le.s32.totalorder 1, %s14
    %p227 = scmp.lt.s32.totalorder %s14, 3
    %p228 = pnand %p226, %p227
    %p229 = pneg %p228
    // Predicated region
    $region9: #{tpu_custom_call.1} parent=5 // pred_check
      _
    $region10: #{tpu_custom_call.1} parent=5 // pred_check_branch
      %231 = sbr.rel (%p228) target = $region12
    $region11: #{tpu_custom_call.1} parent=5 // pred_region
      %s232 = ssub.s32 %s14, 1
      // Predicated region
      $region13: #{tpu_custom_call.1} parent=11 // pred_check
        %p233 = pneg %p87
      $region14: #{tpu_custom_call.1} parent=11 // pred_check_branch
        %235 = sbr.rel (%p233) target = $region16
      $region15: #{tpu_custom_call.1} parent=11 // pred_region
        _
      $region16: #{tpu_custom_call.1} parent=11 // pred_fallthru
        _
      // Predicated region
      $region17: #{tpu_custom_call.1} parent=11 // pred_check
        %p236 = pneg %p108
      $region18: #{tpu_custom_call.1} parent=11 // pred_check_branch
        %238 = sbr.rel (%p236) target = $region20
      $region19: #{tpu_custom_call.1} parent=11 // pred_region
        _
      $region20: #{tpu_custom_call.1} parent=11 // pred_fallthru
        _
      // Predicated region
      $region21: #{tpu_custom_call.1} parent=11 // pred_check
        %p239 = pneg %p129
      $region22: #{tpu_custom_call.1} parent=11 // pred_check_branch
        %241 = sbr.rel (%p239) target = $region24
      $region23: #{tpu_custom_call.1} parent=11 // pred_region
        _
      $region24: #{tpu_custom_call.1} parent=11 // pred_fallthru
        _
      // Predicated region
      $region25: #{tpu_custom_call.1} parent=11 // pred_check
        %p242 = pneg %p150
      $region26: #{tpu_custom_call.1} parent=11 // pred_check_branch
        %244 = sbr.rel (%p242) target = $region28
      $region27: #{tpu_custom_call.1} parent=11 // pred_region
        _
      $region28: #{tpu_custom_call.1} parent=11 // pred_fallthru
        _
      // Predicated region
      $region29: #{tpu_custom_call.1} parent=11 // pred_check
        %p245 = pneg %p171
      $region30: #{tpu_custom_call.1} parent=11 // pred_check_branch
        %247 = sbr.rel (%p245) target = $region32
      $region31: #{tpu_custom_call.1} parent=11 // pred_region
        _
      $region32: #{tpu_custom_call.1} parent=11 // pred_fallthru
        _
      // Predicated region
      $region33: #{tpu_custom_call.1} parent=11 // pred_check
        %p248 = pneg %p192
      $region34: #{tpu_custom_call.1} parent=11 // pred_check_branch
        %250 = sbr.rel (%p248) target = $region36
      $region35: #{tpu_custom_call.1} parent=11 // pred_region
        _
      $region36: #{tpu_custom_call.1} parent=11 // pred_fallthru
        _
    $region12: #{tpu_custom_call.1} parent=5 // pred_fallthru
      _
    %p251 = scmp.lt.s32.totalorder %s14, 2
    // Predicated region
    $region37: #{tpu_custom_call.1} parent=5 // pred_check
      %p252 = pneg %p251
    $region38: #{tpu_custom_call.1} parent=5 // pred_check_branch
      %254 = sbr.rel (%p252) target = $region40
    $region39: #{tpu_custom_call.1} parent=5 // pred_region
      // Predicated region
      $region41: #{tpu_custom_call.1} parent=39 // pred_check
        %p255 = pneg %p34
      $region42: #{tpu_custom_call.1} parent=39 // pred_check_branch
        %257 = sbr.rel (%p255) target = $region44
      $region43: #{tpu_custom_call.1} parent=39 // pred_region
        %s258 = smul.u32 8, %s14
        %p259 = scmp.lt.s32.totalorder %s258, 15
        %s260 = scalar_select %p259, %s258, 15
        %s261 = smul.addr %s260, 4
        %s262 = scalar_lea.vmem %s0, %s261
        %s263 = smul.u32 8, %s14
      $region44: #{tpu_custom_call.1} parent=39 // pred_fallthru
        _
      // Predicated region
      $region45: #{tpu_custom_call.1} parent=39 // pred_check
        %p264 = pneg %p60
      $region46: #{tpu_custom_call.1} parent=39 // pred_check_branch
        %266 = sbr.rel (%p264) target = $region48
      $region47: #{tpu_custom_call.1} parent=39 // pred_region
        %s267 = smul.u32 8, %s14
        %p268 = scmp.lt.s32.totalorder %s267, 15
        %s269 = scalar_select %p268, %s267, 15
        %s270 = smul.addr %s269, 4
        %s271 = scalar_lea.vmem %s1, %s270
        %s272 = smul.u32 8, %s14
      $region48: #{tpu_custom_call.1} parent=39 // pred_fallthru
        _
    $region40: #{tpu_custom_call.1} parent=5 // pred_fallthru
      _
    %p273 = scmp.le.s32.totalorder 1, %s14
    %p274 = scmp.lt.s32.totalorder %s14, 3
    %p275 = pnand %p273, %p274
    %p276 = pneg %p275
    // Predicated region
    $region49: #{tpu_custom_call.1} parent=5 // pred_check
      _
    $region50: #{tpu_custom_call.1} parent=5 // pred_check_branch
      %278 = sbr.rel (%p275) target = $region52
    $region51: #{tpu_custom_call.1} parent=5 // pred_region
      %s279 = ssub.s32 %s14, 1
      %s280 = smul.u32 8, %s19
      %p281 = scmp.lt.s32.totalorder %s280, 15
      %s282 = scalar_select %p281, %s280, 15
      %s283 = smul.addr %s282, 4
      %s284 = scalar_lea.vmem %s0, %s283
      %p285 = pneg %p40
      %p286 = pneg %p37
      %s287 = smul.u32 8, %s19
      %p288 = scmp.lt.s32.totalorder %s287, 15
      %s289 = scalar_select %p288, %s287, 15
      %s290 = smul.addr %s289, 4
      %s291 = scalar_lea.vmem %s1, %s290
      %p292 = pneg %p66
      %p293 = pneg %p63
      %p294 = pneg %p87
      %p295 = pneg %p84
      %p296 = pneg %p108
      %p297 = pneg %p105
      %p298 = pneg %p129
      %p299 = pneg %p126
      %p300 = pneg %p150
      %p301 = pneg %p147
      %p302 = pneg %p171
      %p303 = pneg %p168
      %p304 = pneg %p192
      %p305 = pneg %p189
      %p306 = pneg %p218
      %p307 = pneg %p215
      %p308 = scmp.lt.s32.totalorder %s19, 1
      %s309 = scalar_select %p308, %s19, 1
      %s310 = smul.addr %s309, 8
      %s311 = scalar_lea.vmem %s8, %s310
      %s312 = smul.u32 8, %s19
      %p313 = scmp.lt.s32.totalorder %s312, 15
      %s314 = scalar_select %p313, %s312, 15
      %s315 = smul.addr %s314, 4
      %s316 = scalar_lea.vmem %s0, %s315
      %s317 = smul.u32 8, %s19
      %s318 = smul.u32 8, %s19
      %p319 = scmp.lt.s32.totalorder %s318, 15
      %s320 = scalar_select %p319, %s318, 15
      %s321 = smul.addr %s320, 4
      %s322 = scalar_lea.vmem %s1, %s321
      %s323 = smul.u32 8, %s19
      %p324 = scmp.lt.s32.totalorder %s19, 1
      %s325 = scalar_select %p324, %s19, 1
      %s326 = smul.addr %s325, 8
      %s327 = scalar_lea.vmem %s8, %s326
      %v329 = vld [vmem:[%s316] sm:$0xf]
      %v330 = vld [vmem:[%s316 + $0x4] sm:$0xf]
      %v331 = vld [vmem:[%s316 + $0x8] sm:$0xf]
      %v332 = vld [vmem:[%s316 + $0xc] sm:$0xf]
      %v333 = vld [vmem:[%s316 + $0x10] sm:$0xf]
      %v334 = vld [vmem:[%s316 + $0x14] sm:$0xf]
      %v335 = vld [vmem:[%s316 + $0x18] sm:$0xf]
      %v336 = vld [vmem:[%s316 + $0x1c] sm:$0xf]
      %v337 = vld [vmem:[%s322] sm:$0xf]
      %v338 = vld [vmem:[%s322 + $0x4] sm:$0xf]
      %v339 = vld [vmem:[%s322 + $0x8] sm:$0xf]
      %v340 = vld [vmem:[%s322 + $0xc] sm:$0xf]
      %v341 = vld [vmem:[%s322 + $0x10] sm:$0xf]
      %v342 = vld [vmem:[%s322 + $0x14] sm:$0xf]
      %v343 = vld [vmem:[%s322 + $0x18] sm:$0xf]
      %v344 = vld [vmem:[%s322 + $0x1c] sm:$0xf]
      %v345 = vld [vmem:[%s2] sm:$0xf]
      %v354 = vunpack.c.l.b16 %v337
      %v355 = vunpack.c.l.b16 %v338
      %v356 = vunpack.c.l.b16 %v339
      %v357 = vunpack.c.l.b16 %v340
      %v358 = vunpack.c.l.b16 %v341
      %v359 = vunpack.c.l.b16 %v342
      %v360 = vunpack.c.l.b16 %v343
      %v361 = vunpack.c.l.b16 %v344
      %v362 = vpack.c.b16 %v355, %v354
      %v363 = vpack.c.b16 %v357, %v356
      %v364 = vpack.c.b16 %v359, %v358
      %v365 = vpack.c.b16 %v361, %v360
      %vm366 = vcmask 64512
      %v368 = vsel %vm366, %v362, 0
      %v371 = vsel %vm366, %v363, 0
      %v374 = vsel %vm366, %v364, 0
      %v377 = vsel %vm366, %v365, 0
      %vm379 = vcmask 1043456
      %v381 = vsel %vm379, %v345, 0
      %383 = vmatprep.subr.bf16.mxu0 0
      %384 = vmatpush1.bf16.msra.mxu0 %v381
      %385 = vmatprep.subr.bf16.mxu0 0
      %386 = vmatpush1.bf16.msra.mxu0 0
      %387 = vmatprep.subr.bf16.mxu0 0
      %388 = vmatpush1.bf16.msra.mxu0 0
      %389 = vmatprep.subr.bf16.mxu0 0
      %390 = vmatpush1.bf16.msra.mxu0 0
      %391 = vmatprep.subr.bf16.mxu0 0
      %392 = vmatpush1.bf16.msra.mxu0 0
      %393 = vmatprep.subr.bf16.mxu0 0
      %394 = vmatpush1.bf16.msra.mxu0 0
      %395 = vmatprep.subr.bf16.mxu0 0
      %396 = vmatpush1.bf16.msra.mxu0 0
      %397 = vmatprep.subr.bf16.mxu0 0
      %398 = vmatpush1.bf16.msra.mxu0 0
      %399 = vmatprep.subr.bf16.mxu0 0
      %400 = vmatpush1.bf16.msra.mxu0 0
      %401 = vmatprep.subr.bf16.mxu0 0
      %402 = vmatpush1.bf16.msra.mxu0 0
      %403 = vmatprep.subr.bf16.mxu0 0
      %404 = vmatpush1.bf16.msra.mxu0 0
      %405 = vmatprep.subr.bf16.mxu0 0
      %406 = vmatpush1.bf16.msra.mxu0 0
      %407 = vmatprep.subr.bf16.mxu0 0
      %408 = vmatpush1.bf16.msra.mxu0 0
      %409 = vmatprep.subr.bf16.mxu0 0
      %410 = vmatpush1.bf16.msra.mxu0 0
      %411 = vmatprep.subr.bf16.mxu0 0
      %412 = vmatpush1.bf16.msra.mxu0 0
      %413 = vmatprep.subr.bf16.mxu0 0
      %414 = vmatpush1.bf16.msra.mxu0 0
      %415 = vmatprep.mubr.bf16.mxu0 0
      %416 = vmatmul.mubr.bf16.gmra.mrb[0].mxu0 %v368
      %v417 = vpop.f32.mrb[0].mxu0
      %v418 = vadd.f32 0.0, %v417
      %v419 = vpop.f32.mrb[0].mxu0
      %v420 = vpop.f32.mrb[0].mxu0
      %v421 = vadd.f32 0.0, %v420
      %v422 = vpop.f32.mrb[0].mxu0
      %423 = vmatprep.mubr.bf16.mxu0 0
      %424 = vmatmul.mubr.bf16.gmra.mrb[0].mxu0 %v371
      %v425 = vpop.f32.mrb[0].mxu0
      %v426 = vadd.f32 0.0, %v425
      %v427 = vpop.f32.mrb[0].mxu0
      %v428 = vpop.f32.mrb[0].mxu0
      %v429 = vadd.f32 0.0, %v428
      %v430 = vpop.f32.mrb[0].mxu0
      %431 = vmatprep.mubr.bf16.mxu0 0
      %432 = vmatmul.mubr.bf16.gmra.mrb[0].mxu0 %v374
      %v433 = vpop.f32.mrb[0].mxu0
      %v434 = vadd.f32 0.0, %v433
      %v435 = vpop.f32.mrb[0].mxu0
      %v436 = vpop.f32.mrb[0].mxu0
      %v437 = vadd.f32 0.0, %v436
      %v438 = vpop.f32.mrb[0].mxu0
      %439 = vmatprep.mubr.bf16.mxu0 0
      %440 = vmatmul.mubr.bf16.gmra.mrb[0].mxu0 %v377
      %v441 = vpop.f32.mrb[0].mxu0
      %v442 = vadd.f32 0.0, %v441
      %v443 = vpop.f32.mrb[0].mxu0
      %v444 = vpop.f32.mrb[0].mxu0
      %v445 = vadd.f32 0.0, %v444
      %v446 = vpop.f32.mrb[0].mxu0
      %447 = vdwg.mxu0
      %v448 = vpack.c.bf16 %v421, %v418
      %v449 = vpack.c.bf16 %v429, %v426
      %v450 = vpack.c.bf16 %v437, %v434
      %v451 = vpack.c.bf16 %v445, %v442
      %v456 = vunpack.c.l.b16 %v448
      %v457 = vunpack.c.h.b16 %v448
      %v458 = vunpack.c.l.b16 %v449
      %v459 = vunpack.c.h.b16 %v449
      %v460 = vunpack.c.l.b16 %v450
      %v461 = vunpack.c.h.b16 %v450
      %v462 = vunpack.c.l.b16 %v451
      %v463 = vunpack.c.h.b16 %v451
      %v464 = vpack.c.b16 %v456, %v456
      %v465 = vpack.c.b16 %v457, %v457
      %v466 = vpack.c.b16 %v458, %v458
      %v467 = vpack.c.b16 %v459, %v459
      %v468 = vpack.c.b16 %v460, %v460
      %v469 = vpack.c.b16 %v461, %v461
      %v470 = vpack.c.b16 %v462, %v462
      %v471 = vpack.c.b16 %v463, %v463
      %v472 = vld [vmem:[%s3] sm:$0x1]
      %v474 = vlaneseq
      %v475 = vshrl.u32 %v474, 7
      %v476 = vsub.s32 0, %v475
      %v477 = vrot.slane %v472, %v476
      %v480 = vsel %vm366, %v329, 0
      %v483 = vsel %vm379, %v464, 0
      %485 = vmatprep.subr.bf16.mxu0 0
      %486 = vmatpush1.bf16.msra.mxu0 %v483
      %487 = vmatprep.subr.bf16.mxu0 0
      %488 = vmatpush1.bf16.msra.mxu0 0
      %489 = vmatprep.subr.bf16.mxu0 0
      %490 = vmatpush1.bf16.msra.mxu0 0
      %491 = vmatprep.subr.bf16.mxu0 0
      %492 = vmatpush1.bf16.msra.mxu0 0
      %493 = vmatprep.subr.bf16.mxu0 0
      %494 = vmatpush1.bf16.msra.mxu0 0
      %495 = vmatprep.subr.bf16.mxu0 0
      %496 = vmatpush1.bf16.msra.mxu0 0
      %497 = vmatprep.subr.bf16.mxu0 0
      %498 = vmatpush1.bf16.msra.mxu0 0
      %499 = vmatprep.subr.bf16.mxu0 0
      %500 = vmatpush1.bf16.msra.mxu0 0
      %501 = vmatprep.subr.bf16.mxu0 0
      %502 = vmatpush1.bf16.msra.mxu0 0
      %503 = vmatprep.subr.bf16.mxu0 0
      %504 = vmatpush1.bf16.msra.mxu0 0
      %505 = vmatprep.subr.bf16.mxu0 0
      %506 = vmatpush1.bf16.msra.mxu0 0
      %507 = vmatprep.subr.bf16.mxu0 0
      %508 = vmatpush1.bf16.msra.mxu0 0
      %509 = vmatprep.subr.bf16.mxu0 0
      %510 = vmatpush1.bf16.msra.mxu0 0
      %511 = vmatprep.subr.bf16.mxu0 0
      %512 = vmatpush1.bf16.msra.mxu0 0
      %513 = vmatprep.subr.bf16.mxu0 0
      %514 = vmatpush1.bf16.msra.mxu0 0
      %515 = vmatprep.subr.bf16.mxu0 0
      %516 = vmatpush1.bf16.msra.mxu0 0
      %517 = vmatprep.mubr.bf16.mxu0 0
      %518 = vmatmul.mubr.bf16.gmra.mrb[0].mxu0 %v480
      %v519 = vpop.f32.mrb[0].mxu0
      %v520 = vadd.f32 %v477, %v519
      %v521 = vpop.f32.mrb[0].mxu0
      %v522 = vpop.f32.mrb[0].mxu0
      %v523 = vpop.f32.mrb[0].mxu0
      %524 = vdwg.mxu0
      %v526 = vsel %vm366, %v330, 0
      %v529 = vsel %vm379, %v465, 0
      %531 = vmatprep.subr.bf16.mxu0 0
      %532 = vmatpush1.bf16.msra.mxu0 %v529
      %533 = vmatprep.subr.bf16.mxu0 0
      %534 = vmatpush1.bf16.msra.mxu0 0
      %535 = vmatprep.subr.bf16.mxu0 0
      %536 = vmatpush1.bf16.msra.mxu0 0
      %537 = vmatprep.subr.bf16.mxu0 0
      %538 = vmatpush1.bf16.msra.mxu0 0
      %539 = vmatprep.subr.bf16.mxu0 0
      %540 = vmatpush1.bf16.msra.mxu0 0
      %541 = vmatprep.subr.bf16.mxu0 0
      %542 = vmatpush1.bf16.msra.mxu0 0
      %543 = vmatprep.subr.bf16.mxu0 0
      %544 = vmatpush1.bf16.msra.mxu0 0
      %545 = vmatprep.subr.bf16.mxu0 0
      %546 = vmatpush1.bf16.msra.mxu0 0
      %547 = vmatprep.subr.bf16.mxu0 0
      %548 = vmatpush1.bf16.msra.mxu0 0
      %549 = vmatprep.subr.bf16.mxu0 0
      %550 = vmatpush1.bf16.msra.mxu0 0
      %551 = vmatprep.subr.bf16.mxu0 0
      %552 = vmatpush1.bf16.msra.mxu0 0
      %553 = vmatprep.subr.bf16.mxu0 0
      %554 = vmatpush1.bf16.msra.mxu0 0
      %555 = vmatprep.subr.bf16.mxu0 0
      %556 = vmatpush1.bf16.msra.mxu0 0
      %557 = vmatprep.subr.bf16.mxu0 0
      %558 = vmatpush1.bf16.msra.mxu0 0
      %559 = vmatprep.subr.bf16.mxu0 0
      %560 = vmatpush1.bf16.msra.mxu0 0
      %561 = vmatprep.subr.bf16.mxu0 0
      %562 = vmatpush1.bf16.msra.mxu0 0
      %563 = vmatprep.mubr.bf16.mxu0 0
      %564 = vmatmul.mubr.bf16.gmra.mrb[0].mxu0 %v526
      %v565 = vpop.f32.mrb[0].mxu0
      %v566 = vadd.f32 %v477, %v565
      %v567 = vpop.f32.mrb[0].mxu0
      %v568 = vpop.f32.mrb[0].mxu0
      %v569 = vpop.f32.mrb[0].mxu0
      %570 = vdwg.mxu0
      %v572 = vsel %vm366, %v331, 0
      %v575 = vsel %vm379, %v466, 0
      %577 = vmatprep.subr.bf16.mxu0 0
      %578 = vmatpush1.bf16.msra.mxu0 %v575
      %579 = vmatprep.subr.bf16.mxu0 0
      %580 = vmatpush1.bf16.msra.mxu0 0
      %581 = vmatprep.subr.bf16.mxu0 0
      %582 = vmatpush1.bf16.msra.mxu0 0
      %583 = vmatprep.subr.bf16.mxu0 0
      %584 = vmatpush1.bf16.msra.mxu0 0
      %585 = vmatprep.subr.bf16.mxu0 0
      %586 = vmatpush1.bf16.msra.mxu0 0
      %587 = vmatprep.subr.bf16.mxu0 0
      %588 = vmatpush1.bf16.msra.mxu0 0
      %589 = vmatprep.subr.bf16.mxu0 0
      %590 = vmatpush1.bf16.msra.mxu0 0
      %591 = vmatprep.subr.bf16.mxu0 0
      %592 = vmatpush1.bf16.msra.mxu0 0
      %593 = vmatprep.subr.bf16.mxu0 0
      %594 = vmatpush1.bf16.msra.mxu0 0
      %595 = vmatprep.subr.bf16.mxu0 0
      %596 = vmatpush1.bf16.msra.mxu0 0
      %597 = vmatprep.subr.bf16.mxu0 0
      %598 = vmatpush1.bf16.msra.mxu0 0
      %599 = vmatprep.subr.bf16.mxu0 0
      %600 = vmatpush1.bf16.msra.mxu0 0
      %601 = vmatprep.subr.bf16.mxu0 0
      %602 = vmatpush1.bf16.msra.mxu0 0
      %603 = vmatprep.subr.bf16.mxu0 0
      %604 = vmatpush1.bf16.msra.mxu0 0
      %605 = vmatprep.subr.bf16.mxu0 0
      %606 = vmatpush1.bf16.msra.mxu0 0
      %607 = vmatprep.subr.bf16.mxu0 0
      %608 = vmatpush1.bf16.msra.mxu0 0
      %609 = vmatprep.mubr.bf16.mxu0 0
      %610 = vmatmul.mubr.bf16.gmra.mrb[0].mxu0 %v572
      %v611 = vpop.f32.mrb[0].mxu0
      %v612 = vadd.f32 %v477, %v611
      %v613 = vpop.f32.mrb[0].mxu0
      %v614 = vpop.f32.mrb[0].mxu0
      %v615 = vpop.f32.mrb[0].mxu0
      %616 = vdwg.mxu0
      %v618 = vsel %vm366, %v332, 0
      %v621 = vsel %vm379, %v467, 0
      %623 = vmatprep.subr.bf16.mxu0 0
      %624 = vmatpush1.bf16.msra.mxu0 %v621
      %625 = vmatprep.subr.bf16.mxu0 0
      %626 = vmatpush1.bf16.msra.mxu0 0
      %627 = vmatprep.subr.bf16.mxu0 0
      %628 = vmatpush1.bf16.msra.mxu0 0
      %629 = vmatprep.subr.bf16.mxu0 0
      %630 = vmatpush1.bf16.msra.mxu0 0
      %631 = vmatprep.subr.bf16.mxu0 0
      %632 = vmatpush1.bf16.msra.mxu0 0
      %633 = vmatprep.subr.bf16.mxu0 0
      %634 = vmatpush1.bf16.msra.mxu0 0
      %635 = vmatprep.subr.bf16.mxu0 0
      %636 = vmatpush1.bf16.msra.mxu0 0
      %637 = vmatprep.subr.bf16.mxu0 0
      %638 = vmatpush1.bf16.msra.mxu0 0
      %639 = vmatprep.subr.bf16.mxu0 0
      %640 = vmatpush1.bf16.msra.mxu0 0
      %641 = vmatprep.subr.bf16.mxu0 0
      %642 = vmatpush1.bf16.msra.mxu0 0
      %643 = vmatprep.subr.bf16.mxu0 0
      %644 = vmatpush1.bf16.msra.mxu0 0
      %645 = vmatprep.subr.bf16.mxu0 0
      %646 = vmatpush1.bf16.msra.mxu0 0
      %647 = vmatprep.subr.bf16.mxu0 0
      %648 = vmatpush1.bf16.msra.mxu0 0
      %649 = vmatprep.subr.bf16.mxu0 0
      %650 = vmatpush1.bf16.msra.mxu0 0
      %651 = vmatprep.subr.bf16.mxu0 0
      %652 = vmatpush1.bf16.msra.mxu0 0
      %653 = vmatprep.subr.bf16.mxu0 0
      %654 = vmatpush1.bf16.msra.mxu0 0
      %655 = vmatprep.mubr.bf16.mxu0 0
      %656 = vmatmul.mubr.bf16.gmra.mrb[0].mxu0 %v618
      %v657 = vpop.f32.mrb[0].mxu0
      %v658 = vadd.f32 %v477, %v657
      %v659 = vpop.f32.mrb[0].mxu0
      %v660 = vpop.f32.mrb[0].mxu0
      %v661 = vpop.f32.mrb[0].mxu0
      %662 = vdwg.mxu0
      %v664 = vsel %vm366, %v333, 0
      %v667 = vsel %vm379, %v468, 0
      %669 = vmatprep.subr.bf16.mxu0 0
      %670 = vmatpush1.bf16.msra.mxu0 %v667
      %671 = vmatprep.subr.bf16.mxu0 0
      %672 = vmatpush1.bf16.msra.mxu0 0
      %673 = vmatprep.subr.bf16.mxu0 0
      %674 = vmatpush1.bf16.msra.mxu0 0
      %675 = vmatprep.subr.bf16.mxu0 0
      %676 = vmatpush1.bf16.msra.mxu0 0
      %677 = vmatprep.subr.bf16.mxu0 0
      %678 = vmatpush1.bf16.msra.mxu0 0
      %679 = vmatprep.subr.bf16.mxu0 0
      %680 = vmatpush1.bf16.msra.mxu0 0
      %681 = vmatprep.subr.bf16.mxu0 0
      %682 = vmatpush1.bf16.msra.mxu0 0
      %683 = vmatprep.subr.bf16.mxu0 0
      %684 = vmatpush1.bf16.msra.mxu0 0
      %685 = vmatprep.subr.bf16.mxu0 0
      %686 = vmatpush1.bf16.msra.mxu0 0
      %687 = vmatprep.subr.bf16.mxu0 0
      %688 = vmatpush1.bf16.msra.mxu0 0
      %689 = vmatprep.subr.bf16.mxu0 0
      %690 = vmatpush1.bf16.msra.mxu0 0
      %691 = vmatprep.subr.bf16.mxu0 0
      %692 = vmatpush1.bf16.msra.mxu0 0
      %693 = vmatprep.subr.bf16.mxu0 0
      %694 = vmatpush1.bf16.msra.mxu0 0
      %695 = vmatprep.subr.bf16.mxu0 0
      %696 = vmatpush1.bf16.msra.mxu0 0
      %697 = vmatprep.subr.bf16.mxu0 0
      %698 = vmatpush1.bf16.msra.mxu0 0
      %699 = vmatprep.subr.bf16.mxu0 0
      %700 = vmatpush1.bf16.msra.mxu0 0
      %701 = vmatprep.mubr.bf16.mxu0 0
      %702 = vmatmul.mubr.bf16.gmra.mrb[0].mxu0 %v664
      %v703 = vpop.f32.mrb[0].mxu0
      %v704 = vadd.f32 %v477, %v703
      %v705 = vpop.f32.mrb[0].mxu0
      %v706 = vpop.f32.mrb[0].mxu0
      %v707 = vpop.f32.mrb[0].mxu0
      %708 = vdwg.mxu0
      %v710 = vsel %vm366, %v334, 0
      %v713 = vsel %vm379, %v469, 0
      %715 = vmatprep.subr.bf16.mxu0 0
      %716 = vmatpush1.bf16.msra.mxu0 %v713
      %717 = vmatprep.subr.bf16.mxu0 0
      %718 = vmatpush1.bf16.msra.mxu0 0
      %719 = vmatprep.subr.bf16.mxu0 0
      %720 = vmatpush1.bf16.msra.mxu0 0
      %721 = vmatprep.subr.bf16.mxu0 0
      %722 = vmatpush1.bf16.msra.mxu0 0
      %723 = vmatprep.subr.bf16.mxu0 0
      %724 = vmatpush1.bf16.msra.mxu0 0
      %725 = vmatprep.subr.bf16.mxu0 0
      %726 = vmatpush1.bf16.msra.mxu0 0
      %727 = vmatprep.subr.bf16.mxu0 0
      %728 = vmatpush1.bf16.msra.mxu0 0
      %729 = vmatprep.subr.bf16.mxu0 0
      %730 = vmatpush1.bf16.msra.mxu0 0
      %731 = vmatprep.subr.bf16.mxu0 0
      %732 = vmatpush1.bf16.msra.mxu0 0
      %733 = vmatprep.subr.bf16.mxu0 0
      %734 = vmatpush1.bf16.msra.mxu0 0
      %735 = vmatprep.subr.bf16.mxu0 0
      %736 = vmatpush1.bf16.msra.mxu0 0
      %737 = vmatprep.subr.bf16.mxu0 0
      %738 = vmatpush1.bf16.msra.mxu0 0
      %739 = vmatprep.subr.bf16.mxu0 0
      %740 = vmatpush1.bf16.msra.mxu0 0
      %741 = vmatprep.subr.bf16.mxu0 0
      %742 = vmatpush1.bf16.msra.mxu0 0
      %743 = vmatprep.subr.bf16.mxu0 0
      %744 = vmatpush1.bf16.msra.mxu0 0
      %745 = vmatprep.subr.bf16.mxu0 0
      %746 = vmatpush1.bf16.msra.mxu0 0
      %747 = vmatprep.mubr.bf16.mxu0 0
      %748 = vmatmul.mubr.bf16.gmra.mrb[0].mxu0 %v710
      %v749 = vpop.f32.mrb[0].mxu0
      %v750 = vadd.f32 %v477, %v749
      %v751 = vpop.f32.mrb[0].mxu0
      %v752 = vpop.f32.mrb[0].mxu0
      %v753 = vpop.f32.mrb[0].mxu0
      %754 = vdwg.mxu0
      %v756 = vsel %vm366, %v335, 0
      %v759 = vsel %vm379, %v470, 0
      %761 = vmatprep.subr.bf16.mxu0 0
      %762 = vmatpush1.bf16.msra.mxu0 %v759
      %763 = vmatprep.subr.bf16.mxu0 0
      %764 = vmatpush1.bf16.msra.mxu0 0
      %765 = vmatprep.subr.bf16.mxu0 0
      %766 = vmatpush1.bf16.msra.mxu0 0
      %767 = vmatprep.subr.bf16.mxu0 0
      %768 = vmatpush1.bf16.msra.mxu0 0
      %769 = vmatprep.subr.bf16.mxu0 0
      %770 = vmatpush1.bf16.msra.mxu0 0
      %771 = vmatprep.subr.bf16.mxu0 0
      %772 = vmatpush1.bf16.msra.mxu0 0
      %773 = vmatprep.subr.bf16.mxu0 0
      %774 = vmatpush1.bf16.msra.mxu0 0
      %775 = vmatprep.subr.bf16.mxu0 0
      %776 = vmatpush1.bf16.msra.mxu0 0
      %777 = vmatprep.subr.bf16.mxu0 0
      %778 = vmatpush1.bf16.msra.mxu0 0
      %779 = vmatprep.subr.bf16.mxu0 0
      %780 = vmatpush1.bf16.msra.mxu0 0
      %781 = vmatprep.subr.bf16.mxu0 0
      %782 = vmatpush1.bf16.msra.mxu0 0
      %783 = vmatprep.subr.bf16.mxu0 0
      %784 = vmatpush1.bf16.msra.mxu0 0
      %785 = vmatprep.subr.bf16.mxu0 0
      %786 = vmatpush1.bf16.msra.mxu0 0
      %787 = vmatprep.subr.bf16.mxu0 0
      %788 = vmatpush1.bf16.msra.mxu0 0
      %789 = vmatprep.subr.bf16.mxu0 0
      %790 = vmatpush1.bf16.msra.mxu0 0
      %791 = vmatprep.subr.bf16.mxu0 0
      %792 = vmatpush1.bf16.msra.mxu0 0
      %793 = vmatprep.mubr.bf16.mxu0 0
      %794 = vmatmul.mubr.bf16.gmra.mrb[0].mxu0 %v756
      %v795 = vpop.f32.mrb[0].mxu0
      %v796 = vadd.f32 %v477, %v795
      %v797 = vpop.f32.mrb[0].mxu0
      %v798 = vpop.f32.mrb[0].mxu0
      %v799 = vpop.f32.mrb[0].mxu0
      %800 = vdwg.mxu0
      %v802 = vsel %vm366, %v336, 0
      %v805 = vsel %vm379, %v471, 0
      %807 = vmatprep.subr.bf16.mxu0 0
      %808 = vmatpush1.bf16.msra.mxu0 %v805
      %809 = vmatprep.subr.bf16.mxu0 0
      %810 = vmatpush1.bf16.msra.mxu0 0
      %811 = vmatprep.subr.bf16.mxu0 0
      %812 = vmatpush1.bf16.msra.mxu0 0
      %813 = vmatprep.subr.bf16.mxu0 0
      %814 = vmatpush1.bf16.msra.mxu0 0
      %815 = vmatprep.subr.bf16.mxu0 0
      %816 = vmatpush1.bf16.msra.mxu0 0
      %817 = vmatprep.subr.bf16.mxu0 0
      %818 = vmatpush1.bf16.msra.mxu0 0
      %819 = vmatprep.subr.bf16.mxu0 0
      %820 = vmatpush1.bf16.msra.mxu0 0
      %821 = vmatprep.subr.bf16.mxu0 0
      %822 = vmatpush1.bf16.msra.mxu0 0
      %823 = vmatprep.subr.bf16.mxu0 0
      %824 = vmatpush1.bf16.msra.mxu0 0
      %825 = vmatprep.subr.bf16.mxu0 0
      %826 = vmatpush1.bf16.msra.mxu0 0
      %827 = vmatprep.subr.bf16.mxu0 0
      %828 = vmatpush1.bf16.msra.mxu0 0
      %829 = vmatprep.subr.bf16.mxu0 0
      %830 = vmatpush1.bf16.msra.mxu0 0
      %831 = vmatprep.subr.bf16.mxu0 0
      %832 = vmatpush1.bf16.msra.mxu0 0
      %833 = vmatprep.subr.bf16.mxu0 0
      %834 = vmatpush1.bf16.msra.mxu0 0
      %835 = vmatprep.subr.bf16.mxu0 0
      %836 = vmatpush1.bf16.msra.mxu0 0
      %837 = vmatprep.subr.bf16.mxu0 0
      %838 = vmatpush1.bf16.msra.mxu0 0
      %839 = vmatprep.mubr.bf16.mxu0 0
      %840 = vmatmul.mubr.bf16.gmra.mrb[0].mxu0 %v802
      %v841 = vpop.f32.mrb[0].mxu0
      %v842 = vadd.f32 %v477, %v841
      %v843 = vpop.f32.mrb[0].mxu0
      %v844 = vpop.f32.mrb[0].mxu0
      %v845 = vpop.f32.mrb[0].mxu0
      %846 = vdwg.mxu0
      %v847 = vmax.f32 %v520, 0.0
      %v848 = vmax.f32 %v566, 0.0
      %v849 = vmax.f32 %v612, 0.0
      %v850 = vmax.f32 %v658, 0.0
      %v851 = vmax.f32 %v704, 0.0
      %v852 = vmax.f32 %v750, 0.0
      %v853 = vmax.f32 %v796, 0.0
      %v854 = vmax.f32 %v842, 0.0
      %v855 = vpack.c.bf16 %v847, %v847
      %v856 = vpack.c.bf16 %v848, %v848
      %v857 = vpack.c.bf16 %v849, %v849
      %v858 = vpack.c.bf16 %v850, %v850
      %v859 = vpack.c.bf16 %v851, %v851
      %v860 = vpack.c.bf16 %v852, %v852
      %v861 = vpack.c.bf16 %v853, %v853
      %v862 = vpack.c.bf16 %v854, %v854
      %v863 = vld [vmem:[%s4] sm:$0xf]
      %v864 = vld [vmem:[%s4 + $0x4] sm:$0xf]
      %v865 = vld [vmem:[%s4 + $0x8] sm:$0xf]
      %v866 = vld [vmem:[%s4 + $0xc] sm:$0xf]
      %v875 = vunpack.c.l.b16 %v855
      %v876 = vunpack.c.l.b16 %v856
      %v877 = vunpack.c.l.b16 %v857
      %v878 = vunpack.c.l.b16 %v858
      %v879 = vunpack.c.l.b16 %v859
      %v880 = vunpack.c.l.b16 %v860
      %v881 = vunpack.c.l.b16 %v861
      %v882 = vunpack.c.l.b16 %v862
      %v883 = vpack.c.b16 %v876, %v875
      %v884 = vpack.c.b16 %v878, %v877
      %v885 = vpack.c.b16 %v880, %v879
      %v886 = vpack.c.b16 %v882, %v881
      %v891 = vunpack.c.l.b16 %v863
      %v892 = vunpack.c.l.b16 %v864
      %v893 = vunpack.c.l.b16 %v865
      %v894 = vunpack.c.l.b16 %v866
      %v895 = vpack.c.b16 %v892, %v891
      %v896 = vpack.c.b16 %v894, %v893
      %vm899 = vcmask 261120
      %v901 = vsel %vm899, %v883, 0
      %v904 = vsel %vm899, %v884, 0
      %v907 = vsel %vm899, %v885, 0
      %v910 = vsel %vm899, %v886, 0
      %912 = vmatprep.subr.bf16.mxu0 0
      %913 = vmatpush1.bf16.msra.mxu0 %v895
      %914 = vmatprep.subr.bf16.mxu0 0
      %915 = vmatpush1.bf16.msra.mxu0 %v896
      %916 = vmatprep.subr.bf16.mxu0 0
      %917 = vmatpush1.bf16.msra.mxu0 0
      %918 = vmatprep.subr.bf16.mxu0 0
      %919 = vmatpush1.bf16.msra.mxu0 0
      %920 = vmatprep.subr.bf16.mxu0 0
      %921 = vmatpush1.bf16.msra.mxu0 0
      %922 = vmatprep.subr.bf16.mxu0 0
      %923 = vmatpush1.bf16.msra.mxu0 0
      %924 = vmatprep.subr.bf16.mxu0 0
      %925 = vmatpush1.bf16.msra.mxu0 0
      %926 = vmatprep.subr.bf16.mxu0 0
      %927 = vmatpush1.bf16.msra.mxu0 0
      %928 = vmatprep.subr.bf16.mxu0 0
      %929 = vmatpush1.bf16.msra.mxu0 0
      %930 = vmatprep.subr.bf16.mxu0 0
      %931 = vmatpush1.bf16.msra.mxu0 0
      %932 = vmatprep.subr.bf16.mxu0 0
      %933 = vmatpush1.bf16.msra.mxu0 0
      %934 = vmatprep.subr.bf16.mxu0 0
      %935 = vmatpush1.bf16.msra.mxu0 0
      %936 = vmatprep.subr.bf16.mxu0 0
      %937 = vmatpush1.bf16.msra.mxu0 0
      %938 = vmatprep.subr.bf16.mxu0 0
      %939 = vmatpush1.bf16.msra.mxu0 0
      %940 = vmatprep.subr.bf16.mxu0 0
      %941 = vmatpush1.bf16.msra.mxu0 0
      %942 = vmatprep.subr.bf16.mxu0 0
      %943 = vmatpush1.bf16.msra.mxu0 0
      %944 = vmatprep.mubr.bf16.mxu0 0
      %945 = vmatmul.mubr.bf16.gmra.mrb[0].mxu0 %v901
      %v946 = vpop.f32.mrb[0].mxu0
      %v947 = vadd.f32 0.0, %v946
      %v948 = vpop.f32.mrb[0].mxu0
      %v949 = vpop.f32.mrb[0].mxu0
      %v950 = vadd.f32 0.0, %v949
      %v951 = vpop.f32.mrb[0].mxu0
      %952 = vmatprep.mubr.bf16.mxu0 0
      %953 = vmatmul.mubr.bf16.gmra.mrb[0].mxu0 %v904
      %v954 = vpop.f32.mrb[0].mxu0
      %v955 = vadd.f32 0.0, %v954
      %v956 = vpop.f32.mrb[0].mxu0
      %v957 = vpop.f32.mrb[0].mxu0
      %v958 = vadd.f32 0.0, %v957
      %v959 = vpop.f32.mrb[0].mxu0
      %960 = vmatprep.mubr.bf16.mxu0 0
      %961 = vmatmul.mubr.bf16.gmra.mrb[0].mxu0 %v907
      %v962 = vpop.f32.mrb[0].mxu0
      %v963 = vadd.f32 0.0, %v962
      %v964 = vpop.f32.mrb[0].mxu0
      %v965 = vpop.f32.mrb[0].mxu0
      %v966 = vadd.f32 0.0, %v965
      %v967 = vpop.f32.mrb[0].mxu0
      %968 = vmatprep.mubr.bf16.mxu0 0
      %969 = vmatmul.mubr.bf16.gmra.mrb[0].mxu0 %v910
      %v970 = vpop.f32.mrb[0].mxu0
      %v971 = vadd.f32 0.0, %v970
      %v972 = vpop.f32.mrb[0].mxu0
      %v973 = vpop.f32.mrb[0].mxu0
      %v974 = vadd.f32 0.0, %v973
      %v975 = vpop.f32.mrb[0].mxu0
      %976 = vdwg.mxu0
      %v977 = vpack.c.bf16 %v950, %v947
      %v978 = vpack.c.bf16 %v958, %v955
      %v979 = vpack.c.bf16 %v966, %v963
      %v980 = vpack.c.bf16 %v974, %v971
      %v985 = vunpack.c.l.b16 %v977
      %v986 = vunpack.c.h.b16 %v977
      %v987 = vunpack.c.l.b16 %v978
      %v988 = vunpack.c.h.b16 %v978
      %v989 = vunpack.c.l.b16 %v979
      %v990 = vunpack.c.h.b16 %v979
      %v991 = vunpack.c.l.b16 %v980
      %v992 = vunpack.c.h.b16 %v980
      %v993 = vpack.c.b16 %v985, %v985
      %v994 = vpack.c.b16 %v986, %v986
      %v995 = vpack.c.b16 %v987, %v987
      %v996 = vpack.c.b16 %v988, %v988
      %v997 = vpack.c.b16 %v989, %v989
      %v998 = vpack.c.b16 %v990, %v990
      %v999 = vpack.c.b16 %v991, %v991
      %v1000 = vpack.c.b16 %v992, %v992
      %v1001 = vld [vmem:[%s5] sm:$0x1]
      %v1003 = vlaneseq
      %v1004 = vshrl.u32 %v1003, 7
      %v1005 = vsub.s32 0, %v1004
      %v1006 = vrot.slane %v1001, %v1005
      %v1009 = vsel %vm379, %v993, 0
      %1011 = vmatprep.subr.bf16.mxu0 0
      %1012 = vmatpush1.bf16.msra.mxu0 %v1009
      %1013 = vmatprep.subr.bf16.mxu0 0
      %1014 = vmatpush1.bf16.msra.mxu0 0
      %1015 = vmatprep.subr.bf16.mxu0 0
      %1016 = vmatpush1.bf16.msra.mxu0 0
      %1017 = vmatprep.subr.bf16.mxu0 0
      %1018 = vmatpush1.bf16.msra.mxu0 0
      %1019 = vmatprep.subr.bf16.mxu0 0
      %1020 = vmatpush1.bf16.msra.mxu0 0
      %1021 = vmatprep.subr.bf16.mxu0 0
      %1022 = vmatpush1.bf16.msra.mxu0 0
      %1023 = vmatprep.subr.bf16.mxu0 0
      %1024 = vmatpush1.bf16.msra.mxu0 0
      %1025 = vmatprep.subr.bf16.mxu0 0
      %1026 = vmatpush1.bf16.msra.mxu0 0
      %1027 = vmatprep.subr.bf16.mxu0 0
      %1028 = vmatpush1.bf16.msra.mxu0 0
      %1029 = vmatprep.subr.bf16.mxu0 0
      %1030 = vmatpush1.bf16.msra.mxu0 0
      %1031 = vmatprep.subr.bf16.mxu0 0
      %1032 = vmatpush1.bf16.msra.mxu0 0
      %1033 = vmatprep.subr.bf16.mxu0 0
      %1034 = vmatpush1.bf16.msra.mxu0 0
      %1035 = vmatprep.subr.bf16.mxu0 0
      %1036 = vmatpush1.bf16.msra.mxu0 0
      %1037 = vmatprep.subr.bf16.mxu0 0
      %1038 = vmatpush1.bf16.msra.mxu0 0
      %1039 = vmatprep.subr.bf16.mxu0 0
      %1040 = vmatpush1.bf16.msra.mxu0 0
      %1041 = vmatprep.subr.bf16.mxu0 0
      %1042 = vmatpush1.bf16.msra.mxu0 0
      %1043 = vmatprep.mubr.bf16.mxu0 0
      %1044 = vmatmul.mubr.bf16.gmra.mrb[0].mxu0 %v480
      %v1045 = vpop.f32.mrb[0].mxu0
      %v1046 = vadd.f32 %v1006, %v1045
      %v1047 = vpop.f32.mrb[0].mxu0
      %v1048 = vpop.f32.mrb[0].mxu0
      %v1049 = vpop.f32.mrb[0].mxu0
      %1050 = vdwg.mxu0
      %v1052 = vsel %vm379, %v994, 0
      %1054 = vmatprep.subr.bf16.mxu0 0
      %1055 = vmatpush1.bf16.msra.mxu0 %v1052
      %1056 = vmatprep.subr.bf16.mxu0 0
      %1057 = vmatpush1.bf16.msra.mxu0 0
      %1058 = vmatprep.subr.bf16.mxu0 0
      %1059 = vmatpush1.bf16.msra.mxu0 0
      %1060 = vmatprep.subr.bf16.mxu0 0
      %1061 = vmatpush1.bf16.msra.mxu0 0
      %1062 = vmatprep.subr.bf16.mxu0 0
      %1063 = vmatpush1.bf16.msra.mxu0 0
      %1064 = vmatprep.subr.bf16.mxu0 0
      %1065 = vmatpush1.bf16.msra.mxu0 0
      %1066 = vmatprep.subr.bf16.mxu0 0
      %1067 = vmatpush1.bf16.msra.mxu0 0
      %1068 = vmatprep.subr.bf16.mxu0 0
      %1069 = vmatpush1.bf16.msra.mxu0 0
      %1070 = vmatprep.subr.bf16.mxu0 0
      %1071 = vmatpush1.bf16.msra.mxu0 0
      %1072 = vmatprep.subr.bf16.mxu0 0
      %1073 = vmatpush1.bf16.msra.mxu0 0
      %1074 = vmatprep.subr.bf16.mxu0 0
      %1075 = vmatpush1.bf16.msra.mxu0 0
      %1076 = vmatprep.subr.bf16.mxu0 0
      %1077 = vmatpush1.bf16.msra.mxu0 0
      %1078 = vmatprep.subr.bf16.mxu0 0
      %1079 = vmatpush1.bf16.msra.mxu0 0
      %1080 = vmatprep.subr.bf16.mxu0 0
      %1081 = vmatpush1.bf16.msra.mxu0 0
      %1082 = vmatprep.subr.bf16.mxu0 0
      %1083 = vmatpush1.bf16.msra.mxu0 0
      %1084 = vmatprep.subr.bf16.mxu0 0
      %1085 = vmatpush1.bf16.msra.mxu0 0
      %1086 = vmatprep.mubr.bf16.mxu0 0
      %1087 = vmatmul.mubr.bf16.gmra.mrb[0].mxu0 %v526
      %v1088 = vpop.f32.mrb[0].mxu0
      %v1089 = vadd.f32 %v1006, %v1088
      %v1090 = vpop.f32.mrb[0].mxu0
      %v1091 = vpop.f32.mrb[0].mxu0
      %v1092 = vpop.f32.mrb[0].mxu0
      %1093 = vdwg.mxu0
      %v1095 = vsel %vm379, %v995, 0
      %1097 = vmatprep.subr.bf16.mxu0 0
      %1098 = vmatpush1.bf16.msra.mxu0 %v1095
      %1099 = vmatprep.subr.bf16.mxu0 0
      %1100 = vmatpush1.bf16.msra.mxu0 0
      %1101 = vmatprep.subr.bf16.mxu0 0
      %1102 = vmatpush1.bf16.msra.mxu0 0
      %1103 = vmatprep.subr.bf16.mxu0 0
      %1104 = vmatpush1.bf16.msra.mxu0 0
      %1105 = vmatprep.subr.bf16.mxu0 0
      %1106 = vmatpush1.bf16.msra.mxu0 0
      %1107 = vmatprep.subr.bf16.mxu0 0
      %1108 = vmatpush1.bf16.msra.mxu0 0
      %1109 = vmatprep.subr.bf16.mxu0 0
      %1110 = vmatpush1.bf16.msra.mxu0 0
      %1111 = vmatprep.subr.bf16.mxu0 0
      %1112 = vmatpush1.bf16.msra.mxu0 0
      %1113 = vmatprep.subr.bf16.mxu0 0
      %1114 = vmatpush1.bf16.msra.mxu0 0
      %1115 = vmatprep.subr.bf16.mxu0 0
      %1116 = vmatpush1.bf16.msra.mxu0 0
      %1117 = vmatprep.subr.bf16.mxu0 0
      %1118 = vmatpush1.bf16.msra.mxu0 0
      %1119 = vmatprep.subr.bf16.mxu0 0
      %1120 = vmatpush1.bf16.msra.mxu0 0
      %1121 = vmatprep.subr.bf16.mxu0 0
      %1122 = vmatpush1.bf16.msra.mxu0 0
      %1123 = vmatprep.subr.bf16.mxu0 0
      %1124 = vmatpush1.bf16.msra.mxu0 0
      %1125 = vmatprep.subr.bf16.mxu0 0
      %1126 = vmatpush1.bf16.msra.mxu0 0
      %1127 = vmatprep.subr.bf16.mxu0 0
      %1128 = vmatpush1.bf16.msra.mxu0 0
      %1129 = vmatprep.mubr.bf16.mxu0 0
      %1130 = vmatmul.mubr.bf16.gmra.mrb[0].mxu0 %v572
      %v1131 = vpop.f32.mrb[0].mxu0
      %v1132 = vadd.f32 %v1006, %v1131
      %v1133 = vpop.f32.mrb[0].mxu0
      %v1134 = vpop.f32.mrb[0].mxu0
      %v1135 = vpop.f32.mrb[0].mxu0
      %1136 = vdwg.mxu0
      %v1138 = vsel %vm379, %v996, 0
      %1140 = vmatprep.subr.bf16.mxu0 0
      %1141 = vmatpush1.bf16.msra.mxu0 %v1138
      %1142 = vmatprep.subr.bf16.mxu0 0
      %1143 = vmatpush1.bf16.msra.mxu0 0
      %1144 = vmatprep.subr.bf16.mxu0 0
      %1145 = vmatpush1.bf16.msra.mxu0 0
      %1146 = vmatprep.subr.bf16.mxu0 0
      %1147 = vmatpush1.bf16.msra.mxu0 0
      %1148 = vmatprep.subr.bf16.mxu0 0
      %1149 = vmatpush1.bf16.msra.mxu0 0
      %1150 = vmatprep.subr.bf16.mxu0 0
      %1151 = vmatpush1.bf16.msra.mxu0 0
      %1152 = vmatprep.subr.bf16.mxu0 0
      %1153 = vmatpush1.bf16.msra.mxu0 0
      %1154 = vmatprep.subr.bf16.mxu0 0
      %1155 = vmatpush1.bf16.msra.mxu0 0
      %1156 = vmatprep.subr.bf16.mxu0 0
      %1157 = vmatpush1.bf16.msra.mxu0 0
      %1158 = vmatprep.subr.bf16.mxu0 0
      %1159 = vmatpush1.bf16.msra.mxu0 0
      %1160 = vmatprep.subr.bf16.mxu0 0
      %1161 = vmatpush1.bf16.msra.mxu0 0
      %1162 = vmatprep.subr.bf16.mxu0 0
      %1163 = vmatpush1.bf16.msra.mxu0 0
      %1164 = vmatprep.subr.bf16.mxu0 0
      %1165 = vmatpush1.bf16.msra.mxu0 0
      %1166 = vmatprep.subr.bf16.mxu0 0
      %1167 = vmatpush1.bf16.msra.mxu0 0
      %1168 = vmatprep.subr.bf16.mxu0 0
      %1169 = vmatpush1.bf16.msra.mxu0 0
      %1170 = vmatprep.subr.bf16.mxu0 0
      %1171 = vmatpush1.bf16.msra.mxu0 0
      %1172 = vmatprep.mubr.bf16.mxu0 0
      %1173 = vmatmul.mubr.bf16.gmra.mrb[0].mxu0 %v618
      %v1174 = vpop.f32.mrb[0].mxu0
      %v1175 = vadd.f32 %v1006, %v1174
      %v1176 = vpop.f32.mrb[0].mxu0
      %v1177 = vpop.f32.mrb[0].mxu0
      %v1178 = vpop.f32.mrb[0].mxu0
      %1179 = vdwg.mxu0
      %v1181 = vsel %vm379, %v997, 0
      %1183 = vmatprep.subr.bf16.mxu0 0
      %1184 = vmatpush1.bf16.msra.mxu0 %v1181
      %1185 = vmatprep.subr.bf16.mxu0 0
      %1186 = vmatpush1.bf16.msra.mxu0 0
      %1187 = vmatprep.subr.bf16.mxu0 0
      %1188 = vmatpush1.bf16.msra.mxu0 0
      %1189 = vmatprep.subr.bf16.mxu0 0
      %1190 = vmatpush1.bf16.msra.mxu0 0
      %1191 = vmatprep.subr.bf16.mxu0 0
      %1192 = vmatpush1.bf16.msra.mxu0 0
      %1193 = vmatprep.subr.bf16.mxu0 0
      %1194 = vmatpush1.bf16.msra.mxu0 0
      %1195 = vmatprep.subr.bf16.mxu0 0
      %1196 = vmatpush1.bf16.msra.mxu0 0
      %1197 = vmatprep.subr.bf16.mxu0 0
      %1198 = vmatpush1.bf16.msra.mxu0 0
      %1199 = vmatprep.subr.bf16.mxu0 0
      %1200 = vmatpush1.bf16.msra.mxu0 0
      %1201 = vmatprep.subr.bf16.mxu0 0
      %1202 = vmatpush1.bf16.msra.mxu0 0
      %1203 = vmatprep.subr.bf16.mxu0 0
      %1204 = vmatpush1.bf16.msra.mxu0 0
      %1205 = vmatprep.subr.bf16.mxu0 0
      %1206 = vmatpush1.bf16.msra.mxu0 0
      %1207 = vmatprep.subr.bf16.mxu0 0
      %1208 = vmatpush1.bf16.msra.mxu0 0
      %1209 = vmatprep.subr.bf16.mxu0 0
      %1210 = vmatpush1.bf16.msra.mxu0 0
      %1211 = vmatprep.subr.bf16.mxu0 0
      %1212 = vmatpush1.bf16.msra.mxu0 0
      %1213 = vmatprep.subr.bf16.mxu0 0
      %1214 = vmatpush1.bf16.msra.mxu0 0
      %1215 = vmatprep.mubr.bf16.mxu0 0
      %1216 = vmatmul.mubr.bf16.gmra.mrb[0].mxu0 %v664
      %v1217 = vpop.f32.mrb[0].mxu0
      %v1218 = vadd.f32 %v1006, %v1217
      %v1219 = vpop.f32.mrb[0].mxu0
      %v1220 = vpop.f32.mrb[0].mxu0
      %v1221 = vpop.f32.mrb[0].mxu0
      %1222 = vdwg.mxu0
      %v1224 = vsel %vm379, %v998, 0
      %1226 = vmatprep.subr.bf16.mxu0 0
      %1227 = vmatpush1.bf16.msra.mxu0 %v1224
      %1228 = vmatprep.subr.bf16.mxu0 0
      %1229 = vmatpush1.bf16.msra.mxu0 0
      %1230 = vmatprep.subr.bf16.mxu0 0
      %1231 = vmatpush1.bf16.msra.mxu0 0
      %1232 = vmatprep.subr.bf16.mxu0 0
      %1233 = vmatpush1.bf16.msra.mxu0 0
      %1234 = vmatprep.subr.bf16.mxu0 0
      %1235 = vmatpush1.bf16.msra.mxu0 0
      %1236 = vmatprep.subr.bf16.mxu0 0
      %1237 = vmatpush1.bf16.msra.mxu0 0
      %1238 = vmatprep.subr.bf16.mxu0 0
      %1239 = vmatpush1.bf16.msra.mxu0 0
      %1240 = vmatprep.subr.bf16.mxu0 0
      %1241 = vmatpush1.bf16.msra.mxu0 0
      %1242 = vmatprep.subr.bf16.mxu0 0
      %1243 = vmatpush1.bf16.msra.mxu0 0
      %1244 = vmatprep.subr.bf16.mxu0 0
      %1245 = vmatpush1.bf16.msra.mxu0 0
      %1246 = vmatprep.subr.bf16.mxu0 0
      %1247 = vmatpush1.bf16.msra.mxu0 0
      %1248 = vmatprep.subr.bf16.mxu0 0
      %1249 = vmatpush1.bf16.msra.mxu0 0
      %1250 = vmatprep.subr.bf16.mxu0 0
      %1251 = vmatpush1.bf16.msra.mxu0 0
      %1252 = vmatprep.subr.bf16.mxu0 0
      %1253 = vmatpush1.bf16.msra.mxu0 0
      %1254 = vmatprep.subr.bf16.mxu0 0
      %1255 = vmatpush1.bf16.msra.mxu0 0
      %1256 = vmatprep.subr.bf16.mxu0 0
      %1257 = vmatpush1.bf16.msra.mxu0 0
      %1258 = vmatprep.mubr.bf16.mxu0 0
      %1259 = vmatmul.mubr.bf16.gmra.mrb[0].mxu0 %v710
      %v1260 = vpop.f32.mrb[0].mxu0
      %v1261 = vadd.f32 %v1006, %v1260
      %v1262 = vpop.f32.mrb[0].mxu0
      %v1263 = vpop.f32.mrb[0].mxu0
      %v1264 = vpop.f32.mrb[0].mxu0
      %1265 = vdwg.mxu0
      %v1267 = vsel %vm379, %v999, 0
      %1269 = vmatprep.subr.bf16.mxu0 0
      %1270 = vmatpush1.bf16.msra.mxu0 %v1267
      %1271 = vmatprep.subr.bf16.mxu0 0
      %1272 = vmatpush1.bf16.msra.mxu0 0
      %1273 = vmatprep.subr.bf16.mxu0 0
      %1274 = vmatpush1.bf16.msra.mxu0 0
      %1275 = vmatprep.subr.bf16.mxu0 0
      %1276 = vmatpush1.bf16.msra.mxu0 0
      %1277 = vmatprep.subr.bf16.mxu0 0
      %1278 = vmatpush1.bf16.msra.mxu0 0
      %1279 = vmatprep.subr.bf16.mxu0 0
      %1280 = vmatpush1.bf16.msra.mxu0 0
      %1281 = vmatprep.subr.bf16.mxu0 0
      %1282 = vmatpush1.bf16.msra.mxu0 0
      %1283 = vmatprep.subr.bf16.mxu0 0
      %1284 = vmatpush1.bf16.msra.mxu0 0
      %1285 = vmatprep.subr.bf16.mxu0 0
      %1286 = vmatpush1.bf16.msra.mxu0 0
      %1287 = vmatprep.subr.bf16.mxu0 0
      %1288 = vmatpush1.bf16.msra.mxu0 0
      %1289 = vmatprep.subr.bf16.mxu0 0
      %1290 = vmatpush1.bf16.msra.mxu0 0
      %1291 = vmatprep.subr.bf16.mxu0 0
      %1292 = vmatpush1.bf16.msra.mxu0 0
      %1293 = vmatprep.subr.bf16.mxu0 0
      %1294 = vmatpush1.bf16.msra.mxu0 0
      %1295 = vmatprep.subr.bf16.mxu0 0
      %1296 = vmatpush1.bf16.msra.mxu0 0
      %1297 = vmatprep.subr.bf16.mxu0 0
      %1298 = vmatpush1.bf16.msra.mxu0 0
      %1299 = vmatprep.subr.bf16.mxu0 0
      %1300 = vmatpush1.bf16.msra.mxu0 0
      %1301 = vmatprep.mubr.bf16.mxu0 0
      %1302 = vmatmul.mubr.bf16.gmra.mrb[0].mxu0 %v756
      %v1303 = vpop.f32.mrb[0].mxu0
      %v1304 = vadd.f32 %v1006, %v1303
      %v1305 = vpop.f32.mrb[0].mxu0
      %v1306 = vpop.f32.mrb[0].mxu0
      %v1307 = vpop.f32.mrb[0].mxu0
      %1308 = vdwg.mxu0
      %v1310 = vsel %vm379, %v1000, 0
      %1312 = vmatprep.subr.bf16.mxu0 0
      %1313 = vmatpush1.bf16.msra.mxu0 %v1310
      %1314 = vmatprep.subr.bf16.mxu0 0
      %1315 = vmatpush1.bf16.msra.mxu0 0
      %1316 = vmatprep.subr.bf16.mxu0 0
      %1317 = vmatpush1.bf16.msra.mxu0 0
      %1318 = vmatprep.subr.bf16.mxu0 0
      %1319 = vmatpush1.bf16.msra.mxu0 0
      %1320 = vmatprep.subr.bf16.mxu0 0
      %1321 = vmatpush1.bf16.msra.mxu0 0
      %1322 = vmatprep.subr.bf16.mxu0 0
      %1323 = vmatpush1.bf16.msra.mxu0 0
      %1324 = vmatprep.subr.bf16.mxu0 0
      %1325 = vmatpush1.bf16.msra.mxu0 0
      %1326 = vmatprep.subr.bf16.mxu0 0
      %1327 = vmatpush1.bf16.msra.mxu0 0
      %1328 = vmatprep.subr.bf16.mxu0 0
      %1329 = vmatpush1.bf16.msra.mxu0 0
      %1330 = vmatprep.subr.bf16.mxu0 0
      %1331 = vmatpush1.bf16.msra.mxu0 0
      %1332 = vmatprep.subr.bf16.mxu0 0
      %1333 = vmatpush1.bf16.msra.mxu0 0
      %1334 = vmatprep.subr.bf16.mxu0 0
      %1335 = vmatpush1.bf16.msra.mxu0 0
      %1336 = vmatprep.subr.bf16.mxu0 0
      %1337 = vmatpush1.bf16.msra.mxu0 0
      %1338 = vmatprep.subr.bf16.mxu0 0
      %1339 = vmatpush1.bf16.msra.mxu0 0
      %1340 = vmatprep.subr.bf16.mxu0 0
      %1341 = vmatpush1.bf16.msra.mxu0 0
      %1342 = vmatprep.subr.bf16.mxu0 0
      %1343 = vmatpush1.bf16.msra.mxu0 0
      %1344 = vmatprep.mubr.bf16.mxu0 0
      %1345 = vmatmul.mubr.bf16.gmra.mrb[0].mxu0 %v802
      %v1346 = vpop.f32.mrb[0].mxu0
      %v1347 = vadd.f32 %v1006, %v1346
      %v1348 = vpop.f32.mrb[0].mxu0
      %v1349 = vpop.f32.mrb[0].mxu0
      %v1350 = vpop.f32.mrb[0].mxu0
      %1351 = vdwg.mxu0
      %vm1352 = vcmask 130048
      %v1353 = vsel %vm1352, %v1046, 0.0
      %v1354 = vrot.slane %v1353, 4
      %v1355 = vadd.f32 %v1353, %v1354
      %v1356 = vrot.slane %v1355, 2
      %v1357 = vadd.f32 %v1355, %v1356
      %v1358 = vrot.slane %v1357, 1
      %v1359 = vadd.f32 %v1357, %v1358
      %v1360 = vsel %vm1352, %v1089, 0.0
      %v1361 = vrot.slane %v1360, 4
      %v1362 = vadd.f32 %v1360, %v1361
      %v1363 = vrot.slane %v1362, 2
      %v1364 = vadd.f32 %v1362, %v1363
      %v1365 = vrot.slane %v1364, 1
      %v1366 = vadd.f32 %v1364, %v1365
      %v1367 = vsel %vm1352, %v1132, 0.0
      %v1368 = vrot.slane %v1367, 4
      %v1369 = vadd.f32 %v1367, %v1368
      %v1370 = vrot.slane %v1369, 2
      %v1371 = vadd.f32 %v1369, %v1370
      %v1372 = vrot.slane %v1371, 1
      %v1373 = vadd.f32 %v1371, %v1372
      %v1374 = vsel %vm1352, %v1175, 0.0
      %v1375 = vrot.slane %v1374, 4
      %v1376 = vadd.f32 %v1374, %v1375
      %v1377 = vrot.slane %v1376, 2
      %v1378 = vadd.f32 %v1376, %v1377
      %v1379 = vrot.slane %v1378, 1
      %v1380 = vadd.f32 %v1378, %v1379
      %v1381 = vsel %vm1352, %v1218, 0.0
      %v1382 = vrot.slane %v1381, 4
      %v1383 = vadd.f32 %v1381, %v1382
      %v1384 = vrot.slane %v1383, 2
      %v1385 = vadd.f32 %v1383, %v1384
      %v1386 = vrot.slane %v1385, 1
      %v1387 = vadd.f32 %v1385, %v1386
      %v1388 = vsel %vm1352, %v1261, 0.0
      %v1389 = vrot.slane %v1388, 4
      %v1390 = vadd.f32 %v1388, %v1389
      %v1391 = vrot.slane %v1390, 2
      %v1392 = vadd.f32 %v1390, %v1391
      %v1393 = vrot.slane %v1392, 1
      %v1394 = vadd.f32 %v1392, %v1393
      %v1395 = vsel %vm1352, %v1304, 0.0
      %v1396 = vrot.slane %v1395, 4
      %v1397 = vadd.f32 %v1395, %v1396
      %v1398 = vrot.slane %v1397, 2
      %v1399 = vadd.f32 %v1397, %v1398
      %v1400 = vrot.slane %v1399, 1
      %v1401 = vadd.f32 %v1399, %v1400
      %v1402 = vsel %vm1352, %v1347, 0.0
      %v1403 = vrot.slane %v1402, 4
      %v1404 = vadd.f32 %v1402, %v1403
      %v1405 = vrot.slane %v1404, 2
      %v1406 = vadd.f32 %v1404, %v1405
      %v1407 = vrot.slane %v1406, 1
      %v1408 = vadd.f32 %v1406, %v1407
      %v1409 = vld [vmem:[%s6] sm:$0xff]
      %v1410 = vld [vmem:[%s6 + $0x8] sm:$0xff]
      %v1411 = vld [vmem:[%s7] sm:$0x1]
      %v1413 = vlaneseq
      %v1414 = vshrl.u32 %v1413, 7
      %v1415 = vsub.s32 0, %v1414
      %v1416 = vrot.slane %v1411, %v1415
      %vm1426 = vcmask 1041409
      %v1427 = vsel %vm1426, %v1366, %v1359
      %vm1428 = vcmask 1042434
      %v1429 = vsel %vm1428, %v1373, %v1427
      %vm1430 = vcmask 1043459
      %v1431 = vsel %vm1430, %v1380, %v1429
      %vm1432 = vcmask 1044484
      %v1433 = vsel %vm1432, %v1387, %v1431
      %vm1434 = vcmask 1045509
      %v1435 = vsel %vm1434, %v1394, %v1433
      %vm1436 = vcmask 1046534
      %v1437 = vsel %vm1436, %v1401, %v1435
      %vm1438 = vcmask 1047559
      %v1439 = vsel %vm1438, %v1408, %v1437
      %v1440 = vsel %vm1352, %v1439, 0
      %1442 = vmatprep.subr.mxu0 0.0
      %1443 = vmatpush1.msra.mxu0 %v1409
      %1444 = vmatprep.subr.mxu0 0.0
      %1445 = vmatpush1.msra.mxu0 %v1410
      %1446 = vmatprep.subr.mxu0 0.0
      %1447 = vmatpush1.msra.mxu0 0.0
      %1448 = vmatprep.subr.mxu0 0.0
      %1449 = vmatpush1.msra.mxu0 0.0
      %1450 = vmatprep.subr.mxu0 0.0
      %1451 = vmatpush1.msra.mxu0 0.0
      %1452 = vmatprep.subr.mxu0 0.0
      %1453 = vmatpush1.msra.mxu0 0.0
      %1454 = vmatprep.subr.mxu0 0.0
      %1455 = vmatpush1.msra.mxu0 0.0
      %1456 = vmatprep.subr.mxu0 0.0
      %1457 = vmatpush1.msra.mxu0 0.0
      %1458 = vmatprep.subr.mxu0 0.0
      %1459 = vmatpush1.msra.mxu0 0.0
      %1460 = vmatprep.subr.mxu0 0.0
      %1461 = vmatpush1.msra.mxu0 0.0
      %1462 = vmatprep.subr.mxu0 0.0
      %1463 = vmatpush1.msra.mxu0 0.0
      %1464 = vmatprep.subr.mxu0 0.0
      %1465 = vmatpush1.msra.mxu0 0.0
      %1466 = vmatprep.subr.mxu0 0.0
      %1467 = vmatpush1.msra.mxu0 0.0
      %1468 = vmatprep.subr.mxu0 0.0
      %1469 = vmatpush1.msra.mxu0 0.0
      %1470 = vmatprep.subr.mxu0 0.0
      %1471 = vmatpush1.msra.mxu0 0.0
      %1472 = vmatprep.subr.mxu0 0.0
      %1473 = vmatpush1.msra.mxu0 0.0
      %1474 = vmatprep.subr.mxu0 0.0
      %1475 = vmatpush1.msra.mxu0 0.0
      %1476 = vmatprep.subr.mxu0 0.0
      %1477 = vmatpush1.msra.mxu0 0.0
      %1478 = vmatprep.subr.mxu0 0.0
      %1479 = vmatpush1.msra.mxu0 0.0
      %1480 = vmatprep.subr.mxu0 0.0
      %1481 = vmatpush1.msra.mxu0 0.0
      %1482 = vmatprep.subr.mxu0 0.0
      %1483 = vmatpush1.msra.mxu0 0.0
      %1484 = vmatprep.subr.mxu0 0.0
      %1485 = vmatpush1.msra.mxu0 0.0
      %1486 = vmatprep.subr.mxu0 0.0
      %1487 = vmatpush1.msra.mxu0 0.0
      %1488 = vmatprep.subr.mxu0 0.0
      %1489 = vmatpush1.msra.mxu0 0.0
      %1490 = vmatprep.subr.mxu0 0.0
      %1491 = vmatpush1.msra.mxu0 0.0
      %1492 = vmatprep.subr.mxu0 0.0
      %1493 = vmatpush1.msra.mxu0 0.0
      %1494 = vmatprep.subr.mxu0 0.0
      %1495 = vmatpush1.msra.mxu0 0.0
      %1496 = vmatprep.subr.mxu0 0.0
      %1497 = vmatpush1.msra.mxu0 0.0
      %1498 = vmatprep.subr.mxu0 0.0
      %1499 = vmatpush1.msra.mxu0 0.0
      %1500 = vmatprep.subr.mxu0 0.0
      %1501 = vmatpush1.msra.mxu0 0.0
      %1502 = vmatprep.subr.mxu0 0.0
      %1503 = vmatpush1.msra.mxu0 0.0
      %1504 = vmatprep.subr.mxu0 0.0
      %1505 = vmatpush1.msra.mxu0 0.0
      %1506 = vmatprep.mubr.f32.mxu0 0.0
      %1507 = vmatmul.mubr.f32.gmra.mrb[0].mxu0 %v1440
      %v1508 = vpop.f32.mrb[0].mxu0
      %v1509 = vadd.f32 %v1416, %v1508
      %v1510 = vpop.f32.mrb[0].mxu0
      %1511 = vdwg.mxu0
      %vm1512 = vcmask 31744
      %1513 = vst.msk [vmem:[%s327] sm:$0xff] %vm1512, %v1509
      %p1514 = scmp.lt.s32.totalorder %s19, 1
      %s1515 = scalar_select %p1514, %s19, 1
      %s1516 = smul.addr %s1515, 8
      %s1517 = scalar_lea.vmem %s8, %s1516
      // Predicated region
      $region53: #{tpu_custom_call.1} parent=51 // pred_check
        %p1518 = pneg %p215
      $region54: #{tpu_custom_call.1} parent=51 // pred_check_branch
        %1520 = sbr.rel (%p1518) target = $region56
      $region55: #{tpu_custom_call.1} parent=51 // pred_region
        _
      $region56: #{tpu_custom_call.1} parent=51 // pred_fallthru
        _
    $region52: #{tpu_custom_call.1} parent=5 // pred_fallthru
      _
    %p1521 = scmp.le.s32.totalorder 2, %s14
    // Predicated region
    $region57: #{tpu_custom_call.1} parent=5 // pred_check
      %p1522 = pneg %p1521
    $region58: #{tpu_custom_call.1} parent=5 // pred_check_branch
      %1524 = sbr.rel (%p1522) target = $region60
    $region59: #{tpu_custom_call.1} parent=5 // pred_region
      %s1525 = ssub.s32 %s14, 2
      // Predicated region
      $region61: #{tpu_custom_call.1} parent=59 // pred_check
        %p1526 = pneg %p221
      $region62: #{tpu_custom_call.1} parent=59 // pred_check_branch
        %1528 = sbr.rel (%p1526) target = $region64
      $region63: #{tpu_custom_call.1} parent=59 // pred_region
        %p1529 = scmp.lt.s32.totalorder %s20, 1
        %s1530 = scalar_select %p1529, %s20, 1
        %s1531 = smul.addr %s1530, 8
        %s1532 = scalar_lea.vmem %s8, %s1531
      $region64: #{tpu_custom_call.1} parent=59 // pred_fallthru
        _
    $region60: #{tpu_custom_call.1} parent=5 // pred_fallthru
      _
  $region6: #{tpu_custom_call.1} parent=0 // loop_footer
    %s18 = sadd.s32 1, %s14
  $region7: #{tpu_custom_call.1} parent=0 // loop_footer_branch
    %13 = sbr.rel target = $region3
  $region8: #{tpu_custom_call.1} parent=0 // loop_exit
    _

</llo_original>
